<compile_context>
chip_gen: v7x
topology: tpu7x:2x2x1
jax: 0.10.0
libtpu: 0.0.40
codegen_flags: <defaults>
</compile_context>

<pallas_src>
import functools

import jax
import jax.numpy as jnp
from jax.experimental import pallas as pl
from jax.experimental.pallas import tpu as pltpu

# Deterministic "parameters" implied by __init__:
#   representation index (signature) l and its dimension 2l + 1.
L_INDEX = 3
DIMENSION = 2 * L_INDEX + 1  # 7

_LANE = 128   # pairs per tile row (lane granularity)
_SUB = 8      # sublane granularity for f32 blocks


def _round_up(x, m):
    return ((x + m - 1) // m) * m


def _choose_tiling(n_rows, average_order, target_block_bytes):
    """Pick (rows_per_block, num_blocks): input block ~target bytes, block rows a
    multiple of 8 (or the full extent), and >=2 grid steps when there is enough
    data so v7x's two TensorCores can both be sharded onto the grid."""
    row_bytes = _LANE * average_order * 4
    tm_cap = max(_SUB, (target_block_bytes // row_bytes) // _SUB * _SUB)
    num_blocks = pl.cdiv(n_rows, tm_cap)
    if n_rows >= 2 * _SUB:
        num_blocks = max(num_blocks, 2)      # megacore: give both TCs work
    if num_blocks == 1:
        return n_rows, 1                     # full-extent block (always legal)
    tm = _round_up(pl.cdiv(n_rows, num_blocks), _SUB)
    num_blocks = pl.cdiv(n_rows, tm)
    return tm, num_blocks


def averaged_character_kernel(g_ref, sel_ref, out_ref, *, aff_scale, aff_bias):
    """One grid step over a (tm, 128*A) tile of torus angles in the natural flat
    layout (lane index = pair_in_row * A + subgroup_sample).

      * chi_l(theta) = 1 + 2 * sum_{k<=l} cos(k*theta) via Chebyshev: one cos()
        per element (EUP), the remaining cos(k*theta) are VALU mul/adds.
      * Per-pair sum over the A contiguous samples is a matmul on the otherwise
        idle MXU against a constant 0/1 block-diagonal selector -> lane-dense
        (tm, 128) output.  The lhs is split into three bf16 terms so each dot
        is a single exact-input MXU pass while preserving ~f32 accuracy.
      * The affine factors (dimension, 1/average_order) are applied after the
        reduction, touching 1/A as many elements.
    """
    g = g_ref[...]                               # (tm, 128*A) f32
    c1 = jnp.cos(g)                              # only transcendental
    cos_sum = c1
    t_prev, t_cur = jnp.ones_like(c1), c1
    for _ in range(2, L_INDEX + 1):              # static short unroll, VALU only
        t_prev, t_cur = t_cur, 2.0 * c1 * t_cur - t_prev
        cos_sum = cos_sum + t_cur

    sel = sel_ref[...]                           # (128*A, 128) bf16 in {0, 1}
    hi1 = cos_sum.astype(jnp.bfloat16)
    r1 = cos_sum - hi1.astype(jnp.float32)
    hi2 = r1.astype(jnp.bfloat16)
    r2 = r1 - hi2.astype(jnp.float32)
    hi3 = r2.astype(jnp.bfloat16)
    seg = jnp.dot(hi1, sel, preferred_element_type=jnp.float32)
    seg = seg + jnp.dot(hi2, sel, preferred_element_type=jnp.float32)
    seg = seg + jnp.dot(hi3, sel, preferred_element_type=jnp.float32)

    out_ref[...] = aff_bias + aff_scale * seg    # (tm, 128), lane-dense store


def _chi_mean_ref(gammas_2d):
    """Pure-JAX path mirroring the PyTorch forward exactly (also the
    small-problem fallback).  `gammas_2d` has shape (N, average_order)."""
    g = gammas_2d.astype(jnp.float32)
    chi = jnp.ones_like(g)
    for k in range(1, L_INDEX + 1):
        chi = chi + 2.0 * jnp.cos(float(k) * g)
    return jnp.mean(float(DIMENSION) * chi, axis=-1)


def averaged_lie_group_character(gammas_x_h, average_order, *,
                                 target_block_bytes=2 << 20,
                                 min_pallas_elements=1 << 17):
    """JAX wrapper.  `gammas_x_h` is the flat (N * average_order,) vector of
    torus angles (output of pairwise_embed).  Returns shape (N,) float32."""
    A = int(average_order)
    flat = jnp.asarray(gammas_x_h, dtype=jnp.float32).reshape(-1)
    N = flat.shape[0] // A

    # Tiny problems: a pallas_call launch + one grid step costs several us;
    # let XLA fuse.  Also bail out for absurdly large average_order where even
    # an 8-row block would blow the VMEM budget.
    if N * A < min_pallas_elements or _SUB * _LANE * A * 4 > (8 << 20):
        return _chi_mean_ref(flat.reshape(N, A))

    # Natural layout, no transpose: lane index = (pair % 128) * A + sample.
    n_rows_data = pl.cdiv(N, _LANE)
    tm, num_blocks = _choose_tiling(n_rows_data, A, target_block_bytes)

    if N % _LANE != 0:
        # We have to copy once anyway -> pad all the way to full blocks so no
        # tile is partial.  Zero angles give finite chi and are sliced off.
        n_rows = num_blocks * tm
        flat = jnp.pad(flat, (0, (n_rows * _LANE - N) * A))
    else:
        # Zero-copy path: ragged last block (if any) only produces garbage
        # OUTPUT rows which Pallas masks on store; valid rows are untouched.
        n_rows = n_rows_data
    g2d = flat.reshape(n_rows, _LANE * A)          # free: contiguous view

    # Constant 0/1 block-diagonal selector: sel[p*A + k, p] = 1.  Exact in
    # bf16; its block index never changes, so it is DMA'd only once.
    sel = (jnp.arange(_LANE * A, dtype=jnp.int32)[:, None] // A
           == jnp.arange(_LANE, dtype=jnp.int32)[None, :]).astype(jnp.bfloat16)

    aff_bias = float(DIMENSION)
    aff_scale = 2.0 * float(DIMENSION) / float(A)

    # Explicit VMEM budget: 2x double-buffered input + ~6 tile temporaries
    # + selector + output, with margin.  Keeps the tile sweep reproducible
    # across v5e (16 MiB scoped default) / v6e (32) / v7x (32 of 64 physical).
    in_block = tm * _LANE * A * 4
    sel_bytes = _LANE * A * _LANE * 2
    out_block = tm * _LANE * 4
    vmem_limit = 10 * in_block + 2 * sel_bytes + 2 * out_block + (4 << 20)
    vmem_limit = int(min(max(vmem_limit, 32 << 20), 56 << 20))

    out = pl.pallas_call(
        functools.partial(averaged_character_kernel,
                          aff_scale=aff_scale, aff_bias=aff_bias),
        out_shape=jax.ShapeDtypeStruct((n_rows, _LANE), jnp.float32),
        grid_spec=pltpu.PrefetchScalarGridSpec(
            num_scalar_prefetch=0,
            grid=(num_blocks,),
            in_specs=[
                pl.BlockSpec((tm, _LANE * A), lambda i: (i, 0)),
                pl.BlockSpec((_LANE * A, _LANE), lambda i: (0, 0)),
            ],
            out_specs=pl.BlockSpec((tm, _LANE), lambda i: (i, 0)),
        ),
        compiler_params=pltpu.CompilerParams(
            dimension_semantics=("parallel",),
            vmem_limit_bytes=vmem_limit,
        ),
    )(g2d, sel)

    return out.reshape(-1)[:N]


def _reference(gammas_x_h, average_order):
    """Pure-JAX reference on the flat vector, mirroring the PyTorch forward."""
    return _chi_mean_ref(jnp.asarray(gammas_x_h).reshape(-1, average_order))


if __name__ == "__main__":
    key = jax.random.PRNGKey(0)
    k1, k2 = jax.random.split(key)

    average_order = 8  # number of subgroup samples H

    # Case 1: n = m = 40 base points -> N = 1600 pairs (not a multiple of 128):
    # exercises the minimal pad-to-full-blocks path.
    N1 = 40 * 40
    g1 = jax.random.uniform(k1, (N1 * average_order,),
                            minval=0.0, maxval=jnp.pi, dtype=jnp.float32)
    r1 = averaged_lie_group_character(g1, average_order, min_pallas_elements=0)
    r1 = jax.block_until_ready(r1)
    assert r1.shape == (N1,)
    assert jnp.allclose(r1, _reference(g1, average_order), atol=1e-4, rtol=1e-4)

    # Case 2: N = 6144 pairs (multiple of 128): zero-copy path, 2 grid steps
    # (megacore sharding on v7x).
    N2 = 128 * 48
    g2 = jax.random.uniform(k2, (N2 * average_order,),
                            minval=0.0, maxval=jnp.pi, dtype=jnp.float32)
    r2 = averaged_lie_group_character(g2, average_order, min_pallas_elements=0)
    r2 = jax.block_until_ready(r2)
    assert r2.shape == (N2,)
    assert jnp.allclose(r2, _reference(g2, average_order), atol=1e-4, rtol=1e-4)

    print("KERNEL_OK")
</pallas_src>

<mosaic_0001>
module attributes {stable_mosaic.version = 11 : i64} {
  func.func @averaged_character_kernel(%arg0: i32, %arg1: memref<13x1024xf32, #tpu.memory_space<vmem>>, %arg2: memref<1024x128xbf16, #tpu.memory_space<vmem>>, %arg3: memref<13x128xf32, #tpu.memory_space<vmem>>) attributes {dimension_semantics = [#tpu.dimension_semantics<parallel>], iteration_bounds = array<i64: 1>, scalar_prefetch = 0 : i64, scratch_operands = 0 : i64, tpu.core_type = #tpu.core_type<tc>, window_params = [{transform_indices = @transform_0, window_bounds = array<i64: 13, 1024>}, {pipeline_mode = #tpu.pipeline_mode<synchronous>, transform_indices = @transform_1, window_bounds = array<i64: 1024, 128>}, {transform_indices = @transform_2, window_bounds = array<i64: 13, 128>}]} {
    %c0 = arith.constant 0 : index
    %c0_0 = arith.constant 0 : index
    %0 = vector.load %arg1[%c0, %c0_0] : memref<13x1024xf32, #tpu.memory_space<vmem>>, vector<13x1024xf32>
    %1 = math.cos %0 : vector<13x1024xf32>
    %cst = arith.constant 1.000000e+00 : f32
    %2 = vector.broadcast %cst : f32 to vector<13x1024xf32>
    %cst_1 = arith.constant 2.000000e+00 : f32
    %3 = vector.broadcast %cst_1 : f32 to vector<13x1024xf32>
    %4 = arith.mulf %3, %1 : vector<13x1024xf32>
    %5 = arith.mulf %4, %1 : vector<13x1024xf32>
    %6 = arith.subf %5, %2 : vector<13x1024xf32>
    %7 = arith.addf %1, %6 : vector<13x1024xf32>
    %cst_2 = arith.constant 2.000000e+00 : f32
    %8 = vector.broadcast %cst_2 : f32 to vector<13x1024xf32>
    %9 = arith.mulf %8, %1 : vector<13x1024xf32>
    %10 = arith.mulf %9, %6 : vector<13x1024xf32>
    %11 = arith.subf %10, %1 : vector<13x1024xf32>
    %12 = arith.addf %7, %11 : vector<13x1024xf32>
    %c0_3 = arith.constant 0 : index
    %c0_4 = arith.constant 0 : index
    %13 = vector.load %arg2[%c0_3, %c0_4] : memref<1024x128xbf16, #tpu.memory_space<vmem>>, vector<1024x128xbf16>
    %14 = arith.truncf %12 : vector<13x1024xf32> to vector<13x1024xbf16>
    %15 = arith.extf %14 : vector<13x1024xbf16> to vector<13x1024xf32>
    %16 = arith.subf %12, %15 : vector<13x1024xf32>
    %17 = arith.truncf %16 : vector<13x1024xf32> to vector<13x1024xbf16>
    %18 = arith.extf %17 : vector<13x1024xbf16> to vector<13x1024xf32>
    %19 = arith.subf %16, %18 : vector<13x1024xf32>
    %20 = arith.truncf %19 : vector<13x1024xf32> to vector<13x1024xbf16>
    %cst_5 = arith.constant dense<0.000000e+00> : vector<13x128xf32>
    %21 = tpu.matmul %14, %13, %cst_5 {dimension_numbers = #tpu.dot_dimension_numbers<[1], [0], [0], [1], [0, 0, 1, 1], [], []>} : vector<13x1024xbf16>, vector<1024x128xbf16>, vector<13x128xf32> -> vector<13x128xf32>
    %cst_6 = arith.constant dense<0.000000e+00> : vector<13x128xf32>
    %22 = tpu.matmul %17, %13, %cst_6 {dimension_numbers = #tpu.dot_dimension_numbers<[1], [0], [0], [1], [0, 0, 1, 1], [], []>} : vector<13x1024xbf16>, vector<1024x128xbf16>, vector<13x128xf32> -> vector<13x128xf32>
    %23 = arith.addf %21, %22 : vector<13x128xf32>
    %cst_7 = arith.constant dense<0.000000e+00> : vector<13x128xf32>
    %24 = tpu.matmul %20, %13, %cst_7 {dimension_numbers = #tpu.dot_dimension_numbers<[1], [0], [0], [1], [0, 0, 1, 1], [], []>} : vector<13x1024xbf16>, vector<1024x128xbf16>, vector<13x128xf32> -> vector<13x128xf32>
    %25 = arith.addf %23, %24 : vector<13x128xf32>
    %cst_8 = arith.constant 1.750000e+00 : f32
    %26 = vector.broadcast %cst_8 : f32 to vector<13x128xf32>
    %27 = arith.mulf %26, %25 : vector<13x128xf32>
    %cst_9 = arith.constant 7.000000e+00 : f32
    %28 = vector.broadcast %cst_9 : f32 to vector<13x128xf32>
    %29 = arith.addf %28, %27 : vector<13x128xf32>
    %c0_10 = arith.constant 0 : index
    %c0_11 = arith.constant 0 : index
    %30 = vector.load %arg3[%c0_10, %c0_11] : memref<13x128xf32, #tpu.memory_space<vmem>>, vector<13x128xf32>
    tpu.vector_store %arg3[%c0_10, %c0_11], %29 {strides = array<i32>} : memref<13x128xf32, #tpu.memory_space<vmem>>, vector<13x128xf32>,
    return
  }
  func.func @transform_0(%arg0: i32) -> (i32, i32) {
    %c0_i32 = arith.constant 0 : i32
    %c0_i32_0 = arith.constant 0 : i32
    return %arg0, %c0_i32 : i32, i32
  }
  func.func @transform_1(%arg0: i32) -> (i32, i32) {
    %c0_i32 = arith.constant 0 : i32
    %c0_i32_0 = arith.constant 0 : i32
    %c0_i32_1 = arith.constant 0 : i32
    return %c0_i32, %c0_i32_0 : i32, i32
  }
  func.func @transform_2(%arg0: i32) -> (i32, i32) {
    %c0_i32 = arith.constant 0 : i32
    %c0_i32_0 = arith.constant 0 : i32
    return %arg0, %c0_i32 : i32, i32
  }
}

</mosaic_0001>

<llo_original>
// kernel: tpu_custom_call.1
$region0: #{tpu_custom_call.1}
  #allocation0 [shape = 'u32[]', space=smem, size = 0x4, offset = 0x4, fixed_abs, tag = 'smem constant byte address 0x4 - core index']
  #allocation1 [shape = 'u32[144,128]{1,0:T(1,128)}', space=vmem, size = 0x12000, scoped, tag = 'internal scratch']
  %s0 = inlined_call_operand.hbm [shape: f32[13,1024], index: 0, kind: input, shape index: {}]
  %s1 = inlined_call_operand.hbm [shape: bf16[1024,128], index: 1, kind: input, shape index: {}]
  %s2 = inlined_call_operand.hbm [shape: f32[13,128], index: 2, kind: output, shape index: {}]
  %s3 = sld [smem:[#allocation0]]
  $region26: #{tpu_custom_call.1} parent=0
    _
  %s5 = ssub.s32 1, %s3
  %s6 = scalar_select 0, %s5, %s3
  $region1: #{tpu_custom_call.1} parent=0
    #allocation2 [shape = 'u8[65536]{0}', space=vmem, size = 0x10000, scoped, tag = 'input window, operand 0, single buffered']
    #allocation3 [shape = 's32[1]{0}', space=sflag, size = 0x4, scoped, tag = 'scoped memory for tpu_custom_call.1']
    #allocation4 [shape = 's32[1]{0}', space=sflag, size = 0x4, scoped, tag = 'scoped memory for tpu_custom_call.1']
    #allocation5 [shape = 'u8[262144]{0}', space=vmem, size = 0x40000, scoped, tag = 'input window, operand 1, single buffered']
    #allocation6 [shape = 's32[1]{0}', space=sflag, size = 0x4, scoped, tag = 'scoped memory for tpu_custom_call.1']
    #allocation7 [shape = 'u8[8192]{0}', space=vmem, size = 0x2000, scoped, tag = 'output window, operand 0, single buffered']
    %7 = vsyncpa [#allocation3], 0
    %8 = vsyncpa [#allocation6], 0
    %9 = vsyncpa [#allocation4], 0
    // Predicated region
    $region2: #{tpu_custom_call.1} parent=1 // pred_check
      _
    $region3: #{tpu_custom_call.1} parent=1 // pred_check_branch
      %11 = sbr.rel (0) target = $region5
    $region4: #{tpu_custom_call.1} parent=1 // pred_region
      %s13 = ssub.s32 2048, 2048
      %14 = vsyncadd [#allocation3], %s13
      %s15 = sshll.u32 [#allocation2], 4
      %s16 = int_to_ptr.vmem [resolvable:$true] %s15
      %21 = dma.hbm_to_vmem [thread:$0]  %s0, 2048, %s16, [#allocation3], 1024, 1024, 64
    $region5: #{tpu_custom_call.1} parent=1 // pred_fallthru
      _
    // Predicated region
    $region6: #{tpu_custom_call.1} parent=1 // pred_check
      _
    $region7: #{tpu_custom_call.1} parent=1 // pred_check_branch
      %23 = sbr.rel (0) target = $region9
    $region8: #{tpu_custom_call.1} parent=1 // pred_region
      %s25 = ssub.s32 8192, 8192
      %26 = vsyncadd [#allocation6], %s25
      %s27 = sshll.u32 [#allocation5], 4
      %s28 = int_to_ptr.vmem [resolvable:$true] %s27
      %33 = dma.hbm_to_vmem [thread:$0]  %s1, 8192, %s28, [#allocation6], 64, 64, 4
    $region9: #{tpu_custom_call.1} parent=1 // pred_fallthru
      _
    // Predicated region
    $region10: #{tpu_custom_call.1} parent=1 // pred_check
      _
    $region11: #{tpu_custom_call.1} parent=1 // pred_check_branch
      %35 = sbr.rel (0) target = $region13
    $region12: #{tpu_custom_call.1} parent=1 // pred_region
      %36 = dma.done [#allocation3], 2048
    $region13: #{tpu_custom_call.1} parent=1 // pred_fallthru
      _
    // Predicated region
    $region14: #{tpu_custom_call.1} parent=1 // pred_check
      _
    $region15: #{tpu_custom_call.1} parent=1 // pred_check_branch
      %38 = sbr.rel (0) target = $region17
    $region16: #{tpu_custom_call.1} parent=1 // pred_region
      %39 = dma.done [#allocation6], 8192
    $region17: #{tpu_custom_call.1} parent=1 // pred_fallthru
      _
    %v41 = vld [vmem:[#allocation2] sm:$0xff]
    %v42 = vld [vmem:[#allocation2 + $0x8] sm:$0xff]
    %v43 = vld [vmem:[#allocation2 + $0x10] sm:$0xff]
    %v44 = vld [vmem:[#allocation2 + $0x18] sm:$0xff]
    %v45 = vld [vmem:[#allocation2 + $0x20] sm:$0xff]
    %v46 = vld [vmem:[#allocation2 + $0x28] sm:$0xff]
    %v47 = vld [vmem:[#allocation2 + $0x30] sm:$0xff]
    %v48 = vld [vmem:[#allocation2 + $0x38] sm:$0xff]
    %v49 = vld [vmem:[#allocation2 + $0x40] sm:$0x1f]
    %v50 = vld [vmem:[#allocation2 + $0x48] sm:$0x1f]
    %v51 = vld [vmem:[#allocation2 + $0x50] sm:$0x1f]
    %v52 = vld [vmem:[#allocation2 + $0x58] sm:$0x1f]
    %v53 = vld [vmem:[#allocation2 + $0x60] sm:$0x1f]
    %v54 = vld [vmem:[#allocation2 + $0x68] sm:$0x1f]
    %v55 = vld [vmem:[#allocation2 + $0x70] sm:$0x1f]
    %v56 = vld [vmem:[#allocation2 + $0x78] sm:$0x1f]
    %v57 = vand.u32 2147483647, %v41
    %vm58 = vcmp.le.f32.partialorder %v57, 0.7853982
    %vm59 = vcmp.lt.s32.totalorder %v41, 0
    %v60 = vand.u32 %v41, 2139095040
    %v61 = vshrl.u32 %v60, 23
    %v62 = vsub.s32 %v61, 127
    %v63 = vand.u32 2147483647, %v41
    %v64 = vand.u32 %v63, 8388607
    %v65 = vor.u32 %v64, 8388608
    %v66 = vsub.s32 0, %v65
    %v67 = vadd.s32 %v62, 1
    %vm68 = vcmp.gt.s32.totalorder %v67, 0
    %v69 = vsel %vm68, %v67, 0
    %v70 = vshrl.u32 %v69, 5
    %v71 = vand.u32 %v69, 31
    %v72 = vsub.s32 32, %v71
    %v73 = vshrl.u32 683565275, %v72
    %v74 = vshll.u32 683565275, %v71
    %v75 = vshrl.u32 2475754826, %v72
    %v76 = vor.u32 %v74, %v75
    %v77 = vshll.u32 2475754826, %v71
    %v78 = vshrl.u32 2131351028, %v72
    %v79 = vor.u32 %v77, %v78
    %v80 = vshll.u32 2131351028, %v71
    %v81 = vshrl.u32 2102212464, %v72
    %v82 = vor.u32 %v80, %v81
    %v83 = vshll.u32 2102212464, %v71
    %v84 = vshrl.u32 920167782, %v72
    %v85 = vor.u32 %v83, %v84
    %v86 = vshll.u32 920167782, %v71
    %v87 = vshrl.u32 1326507024, %v72
    %v88 = vor.u32 %v86, %v87
    %vm89 = vcmp.lt.s32.totalorder %v70, 1
    %vm90 = vcmp.lt.s32.totalorder %v70, 2
    %vm91 = vcmp.lt.s32.totalorder %v70, 3
    %vm92 = vcmp.lt.s32.totalorder %v70, 4
    %v93 = vsel %vm89, %v73, %v76
    %v94 = vsel %vm92, %v82, 2102212464
    %v95 = vsel %vm91, %v79, %v94
    %v96 = vsel %vm90, %v93, %v95
    %v97 = vsel %vm89, %v76, %v79
    %v98 = vsel %vm92, %v85, 920167782
    %v99 = vsel %vm91, %v82, %v98
    %v100 = vsel %vm90, %v97, %v99
    %v101 = vsel %vm89, %v79, %v82
    %v102 = vsel %vm92, %v88, 1326507024
    %v103 = vsel %vm91, %v85, %v102
    %v104 = vsel %vm90, %v101, %v103
    %v105 = vshll.u32 %v65, 8
    %v106 = vmul.u32.u64.compose %v105, %v104
    %v107 = vextract.low.u32 %v106
    %v108 = vextract.high.u32 %v106
    %v109 = vmul.u32.u64.compose %v105, %v100
    %v110 = vextract.low.u32 %v109
    %v111 = vextract.high.u32 %v109
    %v112 = vmul.u32 %v105, %v96
    %v113 = vadd.s32 %v108, %v110
    %vm114 = vc.u32 %v108, %v110
    %v115 = vadd.s32 %v111, 1
    %v116 = vsel %vm114, %v115, %v111
    %v117 = vadd.s32 %v112, %v116
    %v118 = vadd.s32 %v117, 536870912
    %v119 = vshrl.u32 %v118, 30
    %v120 = vshll.u32 %v119, 30
    %v121 = vsub.s32 %v117, %v120
    %vm122 = vcmp.lt.s32.totalorder %v121, 0
    %v123 = vsub.s32 0, %v121
    %v124 = vsel %vm122, %v123, %v121
    %v125 = vclz %v124
    %v126 = vsub.s32 %v125, 2
    %vm127 = vcmp.gt.s32.totalorder 0, %v126
    %v128 = vsel %vm127, 0, %v126
    %v129 = vsub.s32 32, %v128
    %v130 = vshll.u32 %v121, %v128
    %v131 = vshrl.u32 %v113, %v129
    %v132 = vor.u32 %v130, %v131
    %v133 = vsub.s32 4294967266, %v128
    %v134 = vadd.s32 %v133, 127
    %v135 = vshll.u32 %v134, 23
    %v136 = vor.u32 4788187, %v135
    %v137 = vand.u32 2147483647, %v136
    %v139 = vcvt.s32.f32 %v132
    %v140 = vmul.f32 %v139, %v137
    %v141 = vxor.u32 %v140, 2147483648
    %v142 = vsel %vm59, %v141, %v140
    %v143 = vsub.s32 4, %v119
    %v144 = vsel %vm59, %v143, %v119
    %v145 = vsel %vm58, %v41, %v142
    %v146 = vsel %vm58, 0, %v144
    %v147 = vcosq.f32.pop %v145
    %v148 = vsinq.f32.pop %v145
    %vm149 = vweird.f32 %v41
    %v150 = vand.u32 %v146, 3
    %vm151 = vcmp.lt.s32.totalorder %v150, 2
    %vm152 = vcmp.eq.s32.totalorder %v150, 0
    %v153 = vxor.u32 %v148, 2147483648
    %v154 = vsel %vm152, %v147, %v153
    %vm155 = vcmp.eq.s32.totalorder %v150, 2
    %v156 = vxor.u32 %v147, 2147483648
    %v157 = vsel %vm155, %v156, %v148
    %v158 = vsel %vm151, %v154, %v157
    %v159 = vsel %vm149, nan, %v158
    %v160 = vand.u32 2147483647, %v42
    %vm161 = vcmp.le.f32.partialorder %v160, 0.7853982
    %vm162 = vcmp.lt.s32.totalorder %v42, 0
    %v163 = vand.u32 %v42, 2139095040
    %v164 = vshrl.u32 %v163, 23
    %v165 = vsub.s32 %v164, 127
    %v166 = vand.u32 2147483647, %v42
    %v167 = vand.u32 %v166, 8388607
    %v168 = vor.u32 %v167, 8388608
    %v169 = vsub.s32 0, %v168
    %v170 = vadd.s32 %v165, 1
    %vm171 = vcmp.gt.s32.totalorder %v170, 0
    %v172 = vsel %vm171, %v170, 0
    %v173 = vshrl.u32 %v172, 5
    %v174 = vand.u32 %v172, 31
    %v175 = vsub.s32 32, %v174
    %v176 = vshrl.u32 683565275, %v175
    %v177 = vshll.u32 683565275, %v174
    %v178 = vshrl.u32 2475754826, %v175
    %v179 = vor.u32 %v177, %v178
    %v180 = vshll.u32 2475754826, %v174
    %v181 = vshrl.u32 2131351028, %v175
    %v182 = vor.u32 %v180, %v181
    %v183 = vshll.u32 2131351028, %v174
    %v184 = vshrl.u32 2102212464, %v175
    %v185 = vor.u32 %v183, %v184
    %v186 = vshll.u32 2102212464, %v174
    %v187 = vshrl.u32 920167782, %v175
    %v188 = vor.u32 %v186, %v187
    %v189 = vshll.u32 920167782, %v174
    %v190 = vshrl.u32 1326507024, %v175
    %v191 = vor.u32 %v189, %v190
    %vm192 = vcmp.lt.s32.totalorder %v173, 1
    %vm193 = vcmp.lt.s32.totalorder %v173, 2
    %vm194 = vcmp.lt.s32.totalorder %v173, 3
    %vm195 = vcmp.lt.s32.totalorder %v173, 4
    %v196 = vsel %vm192, %v176, %v179
    %v197 = vsel %vm195, %v185, 2102212464
    %v198 = vsel %vm194, %v182, %v197
    %v199 = vsel %vm193, %v196, %v198
    %v200 = vsel %vm192, %v179, %v182
    %v201 = vsel %vm195, %v188, 920167782
    %v202 = vsel %vm194, %v185, %v201
    %v203 = vsel %vm193, %v200, %v202
    %v204 = vsel %vm192, %v182, %v185
    %v205 = vsel %vm195, %v191, 1326507024
    %v206 = vsel %vm194, %v188, %v205
    %v207 = vsel %vm193, %v204, %v206
    %v208 = vshll.u32 %v168, 8
    %v209 = vmul.u32.u64.compose %v208, %v207
    %v210 = vextract.low.u32 %v209
    %v211 = vextract.high.u32 %v209
    %v212 = vmul.u32.u64.compose %v208, %v203
    %v213 = vextract.low.u32 %v212
    %v214 = vextract.high.u32 %v212
    %v215 = vmul.u32 %v208, %v199
    %v216 = vadd.s32 %v211, %v213
    %vm217 = vc.u32 %v211, %v213
    %v218 = vadd.s32 %v214, 1
    %v219 = vsel %vm217, %v218, %v214
    %v220 = vadd.s32 %v215, %v219
    %v221 = vadd.s32 %v220, 536870912
    %v222 = vshrl.u32 %v221, 30
    %v223 = vshll.u32 %v222, 30
    %v224 = vsub.s32 %v220, %v223
    %vm225 = vcmp.lt.s32.totalorder %v224, 0
    %v226 = vsub.s32 0, %v224
    %v227 = vsel %vm225, %v226, %v224
    %v228 = vclz %v227
    %v229 = vsub.s32 %v228, 2
    %vm230 = vcmp.gt.s32.totalorder 0, %v229
    %v231 = vsel %vm230, 0, %v229
    %v232 = vsub.s32 32, %v231
    %v233 = vshll.u32 %v224, %v231
    %v234 = vshrl.u32 %v216, %v232
    %v235 = vor.u32 %v233, %v234
    %v236 = vsub.s32 4294967266, %v231
    %v237 = vadd.s32 %v236, 127
    %v238 = vshll.u32 %v237, 23
    %v239 = vor.u32 4788187, %v238
    %v240 = vand.u32 2147483647, %v239
    %v242 = vcvt.s32.f32 %v235
    %v243 = vmul.f32 %v242, %v240
    %v244 = vxor.u32 %v243, 2147483648
    %v245 = vsel %vm162, %v244, %v243
    %v246 = vsub.s32 4, %v222
    %v247 = vsel %vm162, %v246, %v222
    %v248 = vsel %vm161, %v42, %v245
    %v249 = vsel %vm161, 0, %v247
    %v250 = vcosq.f32.pop %v248
    %v251 = vsinq.f32.pop %v248
    %vm252 = vweird.f32 %v42
    %v253 = vand.u32 %v249, 3
    %vm254 = vcmp.lt.s32.totalorder %v253, 2
    %vm255 = vcmp.eq.s32.totalorder %v253, 0
    %v256 = vxor.u32 %v251, 2147483648
    %v257 = vsel %vm255, %v250, %v256
    %vm258 = vcmp.eq.s32.totalorder %v253, 2
    %v259 = vxor.u32 %v250, 2147483648
    %v260 = vsel %vm258, %v259, %v251
    %v261 = vsel %vm254, %v257, %v260
    %v262 = vsel %vm252, nan, %v261
    %v263 = vand.u32 2147483647, %v43
    %vm264 = vcmp.le.f32.partialorder %v263, 0.7853982
    %vm265 = vcmp.lt.s32.totalorder %v43, 0
    %v266 = vand.u32 %v43, 2139095040
    %v267 = vshrl.u32 %v266, 23
    %v268 = vsub.s32 %v267, 127
    %v269 = vand.u32 2147483647, %v43
    %v270 = vand.u32 %v269, 8388607
    %v271 = vor.u32 %v270, 8388608
    %v272 = vsub.s32 0, %v271
    %v273 = vadd.s32 %v268, 1
    %vm274 = vcmp.gt.s32.totalorder %v273, 0
    %v275 = vsel %vm274, %v273, 0
    %v276 = vshrl.u32 %v275, 5
    %v277 = vand.u32 %v275, 31
    %v278 = vsub.s32 32, %v277
    %v279 = vshrl.u32 683565275, %v278
    %v280 = vshll.u32 683565275, %v277
    %v281 = vshrl.u32 2475754826, %v278
    %v282 = vor.u32 %v280, %v281
    %v283 = vshll.u32 2475754826, %v277
    %v284 = vshrl.u32 2131351028, %v278
    %v285 = vor.u32 %v283, %v284
    %v286 = vshll.u32 2131351028, %v277
    %v287 = vshrl.u32 2102212464, %v278
    %v288 = vor.u32 %v286, %v287
    %v289 = vshll.u32 2102212464, %v277
    %v290 = vshrl.u32 920167782, %v278
    %v291 = vor.u32 %v289, %v290
    %v292 = vshll.u32 920167782, %v277
    %v293 = vshrl.u32 1326507024, %v278
    %v294 = vor.u32 %v292, %v293
    %vm295 = vcmp.lt.s32.totalorder %v276, 1
    %vm296 = vcmp.lt.s32.totalorder %v276, 2
    %vm297 = vcmp.lt.s32.totalorder %v276, 3
    %vm298 = vcmp.lt.s32.totalorder %v276, 4
    %v299 = vsel %vm295, %v279, %v282
    %v300 = vsel %vm298, %v288, 2102212464
    %v301 = vsel %vm297, %v285, %v300
    %v302 = vsel %vm296, %v299, %v301
    %v303 = vsel %vm295, %v282, %v285
    %v304 = vsel %vm298, %v291, 920167782
    %v305 = vsel %vm297, %v288, %v304
    %v306 = vsel %vm296, %v303, %v305
    %v307 = vsel %vm295, %v285, %v288
    %v308 = vsel %vm298, %v294, 1326507024
    %v309 = vsel %vm297, %v291, %v308
    %v310 = vsel %vm296, %v307, %v309
    %v311 = vshll.u32 %v271, 8
    %v312 = vmul.u32.u64.compose %v311, %v310
    %v313 = vextract.low.u32 %v312
    %v314 = vextract.high.u32 %v312
    %v315 = vmul.u32.u64.compose %v311, %v306
    %v316 = vextract.low.u32 %v315
    %v317 = vextract.high.u32 %v315
    %v318 = vmul.u32 %v311, %v302
    %v319 = vadd.s32 %v314, %v316
    %vm320 = vc.u32 %v314, %v316
    %v321 = vadd.s32 %v317, 1
    %v322 = vsel %vm320, %v321, %v317
    %v323 = vadd.s32 %v318, %v322
    %v324 = vadd.s32 %v323, 536870912
    %v325 = vshrl.u32 %v324, 30
    %v326 = vshll.u32 %v325, 30
    %v327 = vsub.s32 %v323, %v326
    %vm328 = vcmp.lt.s32.totalorder %v327, 0
    %v329 = vsub.s32 0, %v327
    %v330 = vsel %vm328, %v329, %v327
    %v331 = vclz %v330
    %v332 = vsub.s32 %v331, 2
    %vm333 = vcmp.gt.s32.totalorder 0, %v332
    %v334 = vsel %vm333, 0, %v332
    %v335 = vsub.s32 32, %v334
    %v336 = vshll.u32 %v327, %v334
    %v337 = vshrl.u32 %v319, %v335
    %v338 = vor.u32 %v336, %v337
    %v339 = vsub.s32 4294967266, %v334
    %v340 = vadd.s32 %v339, 127
    %v341 = vshll.u32 %v340, 23
    %v342 = vor.u32 4788187, %v341
    %v343 = vand.u32 2147483647, %v342
    %v345 = vcvt.s32.f32 %v338
    %v346 = vmul.f32 %v345, %v343
    %v347 = vxor.u32 %v346, 2147483648
    %v348 = vsel %vm265, %v347, %v346
    %v349 = vsub.s32 4, %v325
    %v350 = vsel %vm265, %v349, %v325
    %v351 = vsel %vm264, %v43, %v348
    %v352 = vsel %vm264, 0, %v350
    %v353 = vcosq.f32.pop %v351
    %v354 = vsinq.f32.pop %v351
    %vm355 = vweird.f32 %v43
    %v356 = vand.u32 %v352, 3
    %vm357 = vcmp.lt.s32.totalorder %v356, 2
    %vm358 = vcmp.eq.s32.totalorder %v356, 0
    %v359 = vxor.u32 %v354, 2147483648
    %v360 = vsel %vm358, %v353, %v359
    %vm361 = vcmp.eq.s32.totalorder %v356, 2
    %v362 = vxor.u32 %v353, 2147483648
    %v363 = vsel %vm361, %v362, %v354
    %v364 = vsel %vm357, %v360, %v363
    %v365 = vsel %vm355, nan, %v364
    %v366 = vand.u32 2147483647, %v44
    %vm367 = vcmp.le.f32.partialorder %v366, 0.7853982
    %vm368 = vcmp.lt.s32.totalorder %v44, 0
    %v369 = vand.u32 %v44, 2139095040
    %v370 = vshrl.u32 %v369, 23
    %v371 = vsub.s32 %v370, 127
    %v372 = vand.u32 2147483647, %v44
    %v373 = vand.u32 %v372, 8388607
    %v374 = vor.u32 %v373, 8388608
    %v375 = vsub.s32 0, %v374
    %v376 = vadd.s32 %v371, 1
    %vm377 = vcmp.gt.s32.totalorder %v376, 0
    %v378 = vsel %vm377, %v376, 0
    %v379 = vshrl.u32 %v378, 5
    %v380 = vand.u32 %v378, 31
    %v381 = vsub.s32 32, %v380
    %v382 = vshrl.u32 683565275, %v381
    %v383 = vshll.u32 683565275, %v380
    %v384 = vshrl.u32 2475754826, %v381
    %v385 = vor.u32 %v383, %v384
    %v386 = vshll.u32 2475754826, %v380
    %v387 = vshrl.u32 2131351028, %v381
    %v388 = vor.u32 %v386, %v387
    %v389 = vshll.u32 2131351028, %v380
    %v390 = vshrl.u32 2102212464, %v381
    %v391 = vor.u32 %v389, %v390
    %v392 = vshll.u32 2102212464, %v380
    %v393 = vshrl.u32 920167782, %v381
    %v394 = vor.u32 %v392, %v393
    %v395 = vshll.u32 920167782, %v380
    %v396 = vshrl.u32 1326507024, %v381
    %v397 = vor.u32 %v395, %v396
    %vm398 = vcmp.lt.s32.totalorder %v379, 1
    %vm399 = vcmp.lt.s32.totalorder %v379, 2
    %vm400 = vcmp.lt.s32.totalorder %v379, 3
    %vm401 = vcmp.lt.s32.totalorder %v379, 4
    %v402 = vsel %vm398, %v382, %v385
    %v403 = vsel %vm401, %v391, 2102212464
    %v404 = vsel %vm400, %v388, %v403
    %v405 = vsel %vm399, %v402, %v404
    %v406 = vsel %vm398, %v385, %v388
    %v407 = vsel %vm401, %v394, 920167782
    %v408 = vsel %vm400, %v391, %v407
    %v409 = vsel %vm399, %v406, %v408
    %v410 = vsel %vm398, %v388, %v391
    %v411 = vsel %vm401, %v397, 1326507024
    %v412 = vsel %vm400, %v394, %v411
    %v413 = vsel %vm399, %v410, %v412
    %v414 = vshll.u32 %v374, 8
    %v415 = vmul.u32.u64.compose %v414, %v413
    %v416 = vextract.low.u32 %v415
    %v417 = vextract.high.u32 %v415
    %v418 = vmul.u32.u64.compose %v414, %v409
    %v419 = vextract.low.u32 %v418
    %v420 = vextract.high.u32 %v418
    %v421 = vmul.u32 %v414, %v405
    %v422 = vadd.s32 %v417, %v419
    %vm423 = vc.u32 %v417, %v419
    %v424 = vadd.s32 %v420, 1
    %v425 = vsel %vm423, %v424, %v420
    %v426 = vadd.s32 %v421, %v425
    %v427 = vadd.s32 %v426, 536870912
    %v428 = vshrl.u32 %v427, 30
    %v429 = vshll.u32 %v428, 30
    %v430 = vsub.s32 %v426, %v429
    %vm431 = vcmp.lt.s32.totalorder %v430, 0
    %v432 = vsub.s32 0, %v430
    %v433 = vsel %vm431, %v432, %v430
    %v434 = vclz %v433
    %v435 = vsub.s32 %v434, 2
    %vm436 = vcmp.gt.s32.totalorder 0, %v435
    %v437 = vsel %vm436, 0, %v435
    %v438 = vsub.s32 32, %v437
    %v439 = vshll.u32 %v430, %v437
    %v440 = vshrl.u32 %v422, %v438
    %v441 = vor.u32 %v439, %v440
    %v442 = vsub.s32 4294967266, %v437
    %v443 = vadd.s32 %v442, 127
    %v444 = vshll.u32 %v443, 23
    %v445 = vor.u32 4788187, %v444
    %v446 = vand.u32 2147483647, %v445
    %v448 = vcvt.s32.f32 %v441
    %v449 = vmul.f32 %v448, %v446
    %v450 = vxor.u32 %v449, 2147483648
    %v451 = vsel %vm368, %v450, %v449
    %v452 = vsub.s32 4, %v428
    %v453 = vsel %vm368, %v452, %v428
    %v454 = vsel %vm367, %v44, %v451
    %v455 = vsel %vm367, 0, %v453
    %v456 = vcosq.f32.pop %v454
    %v457 = vsinq.f32.pop %v454
    %vm458 = vweird.f32 %v44
    %v459 = vand.u32 %v455, 3
    %vm460 = vcmp.lt.s32.totalorder %v459, 2
    %vm461 = vcmp.eq.s32.totalorder %v459, 0
    %v462 = vxor.u32 %v457, 2147483648
    %v463 = vsel %vm461, %v456, %v462
    %vm464 = vcmp.eq.s32.totalorder %v459, 2
    %v465 = vxor.u32 %v456, 2147483648
    %v466 = vsel %vm464, %v465, %v457
    %v467 = vsel %vm460, %v463, %v466
    %v468 = vsel %vm458, nan, %v467
    %v469 = vand.u32 2147483647, %v45
    %vm470 = vcmp.le.f32.partialorder %v469, 0.7853982
    %vm471 = vcmp.lt.s32.totalorder %v45, 0
    %v472 = vand.u32 %v45, 2139095040
    %v473 = vshrl.u32 %v472, 23
    %v474 = vsub.s32 %v473, 127
    %v475 = vand.u32 2147483647, %v45
    %v476 = vand.u32 %v475, 8388607
    %v477 = vor.u32 %v476, 8388608
    %v478 = vsub.s32 0, %v477
    %v479 = vadd.s32 %v474, 1
    %vm480 = vcmp.gt.s32.totalorder %v479, 0
    %v481 = vsel %vm480, %v479, 0
    %v482 = vshrl.u32 %v481, 5
    %v483 = vand.u32 %v481, 31
    %v484 = vsub.s32 32, %v483
    %v485 = vshrl.u32 683565275, %v484
    %v486 = vshll.u32 683565275, %v483
    %v487 = vshrl.u32 2475754826, %v484
    %v488 = vor.u32 %v486, %v487
    %v489 = vshll.u32 2475754826, %v483
    %v490 = vshrl.u32 2131351028, %v484
    %v491 = vor.u32 %v489, %v490
    %v492 = vshll.u32 2131351028, %v483
    %v493 = vshrl.u32 2102212464, %v484
    %v494 = vor.u32 %v492, %v493
    %v495 = vshll.u32 2102212464, %v483
    %v496 = vshrl.u32 920167782, %v484
    %v497 = vor.u32 %v495, %v496
    %v498 = vshll.u32 920167782, %v483
    %v499 = vshrl.u32 1326507024, %v484
    %v500 = vor.u32 %v498, %v499
    %vm501 = vcmp.lt.s32.totalorder %v482, 1
    %vm502 = vcmp.lt.s32.totalorder %v482, 2
    %vm503 = vcmp.lt.s32.totalorder %v482, 3
    %vm504 = vcmp.lt.s32.totalorder %v482, 4
    %v505 = vsel %vm501, %v485, %v488
    %v506 = vsel %vm504, %v494, 2102212464
    %v507 = vsel %vm503, %v491, %v506
    %v508 = vsel %vm502, %v505, %v507
    %v509 = vsel %vm501, %v488, %v491
    %v510 = vsel %vm504, %v497, 920167782
    %v511 = vsel %vm503, %v494, %v510
    %v512 = vsel %vm502, %v509, %v511
    %v513 = vsel %vm501, %v491, %v494
    %v514 = vsel %vm504, %v500, 1326507024
    %v515 = vsel %vm503, %v497, %v514
    %v516 = vsel %vm502, %v513, %v515
    %v517 = vshll.u32 %v477, 8
    %v518 = vmul.u32.u64.compose %v517, %v516
    %v519 = vextract.low.u32 %v518
    %v520 = vextract.high.u32 %v518
    %v521 = vmul.u32.u64.compose %v517, %v512
    %v522 = vextract.low.u32 %v521
    %v523 = vextract.high.u32 %v521
    %v524 = vmul.u32 %v517, %v508
    %v525 = vadd.s32 %v520, %v522
    %vm526 = vc.u32 %v520, %v522
    %v527 = vadd.s32 %v523, 1
    %v528 = vsel %vm526, %v527, %v523
    %v529 = vadd.s32 %v524, %v528
    %v530 = vadd.s32 %v529, 536870912
    %v531 = vshrl.u32 %v530, 30
    %v532 = vshll.u32 %v531, 30
    %v533 = vsub.s32 %v529, %v532
    %vm534 = vcmp.lt.s32.totalorder %v533, 0
    %v535 = vsub.s32 0, %v533
    %v536 = vsel %vm534, %v535, %v533
    %v537 = vclz %v536
    %v538 = vsub.s32 %v537, 2
    %vm539 = vcmp.gt.s32.totalorder 0, %v538
    %v540 = vsel %vm539, 0, %v538
    %v541 = vsub.s32 32, %v540
    %v542 = vshll.u32 %v533, %v540
    %v543 = vshrl.u32 %v525, %v541
    %v544 = vor.u32 %v542, %v543
    %v545 = vsub.s32 4294967266, %v540
    %v546 = vadd.s32 %v545, 127
    %v547 = vshll.u32 %v546, 23
    %v548 = vor.u32 4788187, %v547
    %v549 = vand.u32 2147483647, %v548
    %v551 = vcvt.s32.f32 %v544
    %v552 = vmul.f32 %v551, %v549
    %v553 = vxor.u32 %v552, 2147483648
    %v554 = vsel %vm471, %v553, %v552
    %v555 = vsub.s32 4, %v531
    %v556 = vsel %vm471, %v555, %v531
    %v557 = vsel %vm470, %v45, %v554
    %v558 = vsel %vm470, 0, %v556
    %v559 = vcosq.f32.pop %v557
    %v560 = vsinq.f32.pop %v557
    %vm561 = vweird.f32 %v45
    %v562 = vand.u32 %v558, 3
    %vm563 = vcmp.lt.s32.totalorder %v562, 2
    %vm564 = vcmp.eq.s32.totalorder %v562, 0
    %v565 = vxor.u32 %v560, 2147483648
    %v566 = vsel %vm564, %v559, %v565
    %vm567 = vcmp.eq.s32.totalorder %v562, 2
    %v568 = vxor.u32 %v559, 2147483648
    %v569 = vsel %vm567, %v568, %v560
    %v570 = vsel %vm563, %v566, %v569
    %v571 = vsel %vm561, nan, %v570
    %v572 = vand.u32 2147483647, %v46
    %vm573 = vcmp.le.f32.partialorder %v572, 0.7853982
    %vm574 = vcmp.lt.s32.totalorder %v46, 0
    %v575 = vand.u32 %v46, 2139095040
    %v576 = vshrl.u32 %v575, 23
    %v577 = vsub.s32 %v576, 127
    %v578 = vand.u32 2147483647, %v46
    %v579 = vand.u32 %v578, 8388607
    %v580 = vor.u32 %v579, 8388608
    %v581 = vsub.s32 0, %v580
    %v582 = vadd.s32 %v577, 1
    %vm583 = vcmp.gt.s32.totalorder %v582, 0
    %v584 = vsel %vm583, %v582, 0
    %v585 = vshrl.u32 %v584, 5
    %v586 = vand.u32 %v584, 31
    %v587 = vsub.s32 32, %v586
    %v588 = vshrl.u32 683565275, %v587
    %v589 = vshll.u32 683565275, %v586
    %v590 = vshrl.u32 2475754826, %v587
    %v591 = vor.u32 %v589, %v590
    %v592 = vshll.u32 2475754826, %v586
    %v593 = vshrl.u32 2131351028, %v587
    %v594 = vor.u32 %v592, %v593
    %v595 = vshll.u32 2131351028, %v586
    %v596 = vshrl.u32 2102212464, %v587
    %v597 = vor.u32 %v595, %v596
    %v598 = vshll.u32 2102212464, %v586
    %v599 = vshrl.u32 920167782, %v587
    %v600 = vor.u32 %v598, %v599
    %v601 = vshll.u32 920167782, %v586
    %v602 = vshrl.u32 1326507024, %v587
    %v603 = vor.u32 %v601, %v602
    %vm604 = vcmp.lt.s32.totalorder %v585, 1
    %vm605 = vcmp.lt.s32.totalorder %v585, 2
    %vm606 = vcmp.lt.s32.totalorder %v585, 3
    %vm607 = vcmp.lt.s32.totalorder %v585, 4
    %v608 = vsel %vm604, %v588, %v591
    %v609 = vsel %vm607, %v597, 2102212464
    %v610 = vsel %vm606, %v594, %v609
    %v611 = vsel %vm605, %v608, %v610
    %v612 = vsel %vm604, %v591, %v594
    %v613 = vsel %vm607, %v600, 920167782
    %v614 = vsel %vm606, %v597, %v613
    %v615 = vsel %vm605, %v612, %v614
    %v616 = vsel %vm604, %v594, %v597
    %v617 = vsel %vm607, %v603, 1326507024
    %v618 = vsel %vm606, %v600, %v617
    %v619 = vsel %vm605, %v616, %v618
    %v620 = vshll.u32 %v580, 8
    %v621 = vmul.u32.u64.compose %v620, %v619
    %v622 = vextract.low.u32 %v621
    %v623 = vextract.high.u32 %v621
    %v624 = vmul.u32.u64.compose %v620, %v615
    %v625 = vextract.low.u32 %v624
    %v626 = vextract.high.u32 %v624
    %v627 = vmul.u32 %v620, %v611
    %v628 = vadd.s32 %v623, %v625
    %vm629 = vc.u32 %v623, %v625
    %v630 = vadd.s32 %v626, 1
    %v631 = vsel %vm629, %v630, %v626
    %v632 = vadd.s32 %v627, %v631
    %v633 = vadd.s32 %v632, 536870912
    %v634 = vshrl.u32 %v633, 30
    %v635 = vshll.u32 %v634, 30
    %v636 = vsub.s32 %v632, %v635
    %vm637 = vcmp.lt.s32.totalorder %v636, 0
    %v638 = vsub.s32 0, %v636
    %v639 = vsel %vm637, %v638, %v636
    %v640 = vclz %v639
    %v641 = vsub.s32 %v640, 2
    %vm642 = vcmp.gt.s32.totalorder 0, %v641
    %v643 = vsel %vm642, 0, %v641
    %v644 = vsub.s32 32, %v643
    %v645 = vshll.u32 %v636, %v643
    %v646 = vshrl.u32 %v628, %v644
    %v647 = vor.u32 %v645, %v646
    %v648 = vsub.s32 4294967266, %v643
    %v649 = vadd.s32 %v648, 127
    %v650 = vshll.u32 %v649, 23
    %v651 = vor.u32 4788187, %v650
    %v652 = vand.u32 2147483647, %v651
    %v654 = vcvt.s32.f32 %v647
    %v655 = vmul.f32 %v654, %v652
    %v656 = vxor.u32 %v655, 2147483648
    %v657 = vsel %vm574, %v656, %v655
    %v658 = vsub.s32 4, %v634
    %v659 = vsel %vm574, %v658, %v634
    %v660 = vsel %vm573, %v46, %v657
    %v661 = vsel %vm573, 0, %v659
    %v662 = vcosq.f32.pop %v660
    %v663 = vsinq.f32.pop %v660
    %vm664 = vweird.f32 %v46
    %v665 = vand.u32 %v661, 3
    %vm666 = vcmp.lt.s32.totalorder %v665, 2
    %vm667 = vcmp.eq.s32.totalorder %v665, 0
    %v668 = vxor.u32 %v663, 2147483648
    %v669 = vsel %vm667, %v662, %v668
    %vm670 = vcmp.eq.s32.totalorder %v665, 2
    %v671 = vxor.u32 %v662, 2147483648
    %v672 = vsel %vm670, %v671, %v663
    %v673 = vsel %vm666, %v669, %v672
    %v674 = vsel %vm664, nan, %v673
    %v675 = vand.u32 2147483647, %v47
    %vm676 = vcmp.le.f32.partialorder %v675, 0.7853982
    %vm677 = vcmp.lt.s32.totalorder %v47, 0
    %v678 = vand.u32 %v47, 2139095040
    %v679 = vshrl.u32 %v678, 23
    %v680 = vsub.s32 %v679, 127
    %v681 = vand.u32 2147483647, %v47
    %v682 = vand.u32 %v681, 8388607
    %v683 = vor.u32 %v682, 8388608
    %v684 = vsub.s32 0, %v683
    %v685 = vadd.s32 %v680, 1
    %vm686 = vcmp.gt.s32.totalorder %v685, 0
    %v687 = vsel %vm686, %v685, 0
    %v688 = vshrl.u32 %v687, 5
    %v689 = vand.u32 %v687, 31
    %v690 = vsub.s32 32, %v689
    %v691 = vshrl.u32 683565275, %v690
    %v692 = vshll.u32 683565275, %v689
    %v693 = vshrl.u32 2475754826, %v690
    %v694 = vor.u32 %v692, %v693
    %v695 = vshll.u32 2475754826, %v689
    %v696 = vshrl.u32 2131351028, %v690
    %v697 = vor.u32 %v695, %v696
    %v698 = vshll.u32 2131351028, %v689
    %v699 = vshrl.u32 2102212464, %v690
    %v700 = vor.u32 %v698, %v699
    %v701 = vshll.u32 2102212464, %v689
    %v702 = vshrl.u32 920167782, %v690
    %v703 = vor.u32 %v701, %v702
    %v704 = vshll.u32 920167782, %v689
    %v705 = vshrl.u32 1326507024, %v690
    %v706 = vor.u32 %v704, %v705
    %vm707 = vcmp.lt.s32.totalorder %v688, 1
    %vm708 = vcmp.lt.s32.totalorder %v688, 2
    %vm709 = vcmp.lt.s32.totalorder %v688, 3
    %vm710 = vcmp.lt.s32.totalorder %v688, 4
    %v711 = vsel %vm707, %v691, %v694
    %v712 = vsel %vm710, %v700, 2102212464
    %v713 = vsel %vm709, %v697, %v712
    %v714 = vsel %vm708, %v711, %v713
    %v715 = vsel %vm707, %v694, %v697
    %v716 = vsel %vm710, %v703, 920167782
    %v717 = vsel %vm709, %v700, %v716
    %v718 = vsel %vm708, %v715, %v717
    %v719 = vsel %vm707, %v697, %v700
    %v720 = vsel %vm710, %v706, 1326507024
    %v721 = vsel %vm709, %v703, %v720
    %v722 = vsel %vm708, %v719, %v721
    %v723 = vshll.u32 %v683, 8
    %v724 = vmul.u32.u64.compose %v723, %v722
    %v725 = vextract.low.u32 %v724
    %v726 = vextract.high.u32 %v724
    %v727 = vmul.u32.u64.compose %v723, %v718
    %v728 = vextract.low.u32 %v727
    %v729 = vextract.high.u32 %v727
    %v730 = vmul.u32 %v723, %v714
    %v731 = vadd.s32 %v726, %v728
    %vm732 = vc.u32 %v726, %v728
    %v733 = vadd.s32 %v729, 1
    %v734 = vsel %vm732, %v733, %v729
    %v735 = vadd.s32 %v730, %v734
    %v736 = vadd.s32 %v735, 536870912
    %v737 = vshrl.u32 %v736, 30
    %v738 = vshll.u32 %v737, 30
    %v739 = vsub.s32 %v735, %v738
    %vm740 = vcmp.lt.s32.totalorder %v739, 0
    %v741 = vsub.s32 0, %v739
    %v742 = vsel %vm740, %v741, %v739
    %v743 = vclz %v742
    %v744 = vsub.s32 %v743, 2
    %vm745 = vcmp.gt.s32.totalorder 0, %v744
    %v746 = vsel %vm745, 0, %v744
    %v747 = vsub.s32 32, %v746
    %v748 = vshll.u32 %v739, %v746
    %v749 = vshrl.u32 %v731, %v747
    %v750 = vor.u32 %v748, %v749
    %v751 = vsub.s32 4294967266, %v746
    %v752 = vadd.s32 %v751, 127
    %v753 = vshll.u32 %v752, 23
    %v754 = vor.u32 4788187, %v753
    %v755 = vand.u32 2147483647, %v754
    %v757 = vcvt.s32.f32 %v750
    %v758 = vmul.f32 %v757, %v755
    %v759 = vxor.u32 %v758, 2147483648
    %v760 = vsel %vm677, %v759, %v758
    %v761 = vsub.s32 4, %v737
    %v762 = vsel %vm677, %v761, %v737
    %v763 = vsel %vm676, %v47, %v760
    %v764 = vsel %vm676, 0, %v762
    %v765 = vcosq.f32.pop %v763
    %v766 = vsinq.f32.pop %v763
    %vm767 = vweird.f32 %v47
    %v768 = vand.u32 %v764, 3
    %vm769 = vcmp.lt.s32.totalorder %v768, 2
    %vm770 = vcmp.eq.s32.totalorder %v768, 0
    %v771 = vxor.u32 %v766, 2147483648
    %v772 = vsel %vm770, %v765, %v771
    %vm773 = vcmp.eq.s32.totalorder %v768, 2
    %v774 = vxor.u32 %v765, 2147483648
    %v775 = vsel %vm773, %v774, %v766
    %v776 = vsel %vm769, %v772, %v775
    %v777 = vsel %vm767, nan, %v776
    %v778 = vand.u32 2147483647, %v48
    %vm779 = vcmp.le.f32.partialorder %v778, 0.7853982
    %vm780 = vcmp.lt.s32.totalorder %v48, 0
    %v781 = vand.u32 %v48, 2139095040
    %v782 = vshrl.u32 %v781, 23
    %v783 = vsub.s32 %v782, 127
    %v784 = vand.u32 2147483647, %v48
    %v785 = vand.u32 %v784, 8388607
    %v786 = vor.u32 %v785, 8388608
    %v787 = vsub.s32 0, %v786
    %v788 = vadd.s32 %v783, 1
    %vm789 = vcmp.gt.s32.totalorder %v788, 0
    %v790 = vsel %vm789, %v788, 0
    %v791 = vshrl.u32 %v790, 5
    %v792 = vand.u32 %v790, 31
    %v793 = vsub.s32 32, %v792
    %v794 = vshrl.u32 683565275, %v793
    %v795 = vshll.u32 683565275, %v792
    %v796 = vshrl.u32 2475754826, %v793
    %v797 = vor.u32 %v795, %v796
    %v798 = vshll.u32 2475754826, %v792
    %v799 = vshrl.u32 2131351028, %v793
    %v800 = vor.u32 %v798, %v799
    %v801 = vshll.u32 2131351028, %v792
    %v802 = vshrl.u32 2102212464, %v793
    %v803 = vor.u32 %v801, %v802
    %v804 = vshll.u32 2102212464, %v792
    %v805 = vshrl.u32 920167782, %v793
    %v806 = vor.u32 %v804, %v805
    %v807 = vshll.u32 920167782, %v792
    %v808 = vshrl.u32 1326507024, %v793
    %v809 = vor.u32 %v807, %v808
    %vm810 = vcmp.lt.s32.totalorder %v791, 1
    %vm811 = vcmp.lt.s32.totalorder %v791, 2
    %vm812 = vcmp.lt.s32.totalorder %v791, 3
    %vm813 = vcmp.lt.s32.totalorder %v791, 4
    %v814 = vsel %vm810, %v794, %v797
    %v815 = vsel %vm813, %v803, 2102212464
    %v816 = vsel %vm812, %v800, %v815
    %v817 = vsel %vm811, %v814, %v816
    %v818 = vsel %vm810, %v797, %v800
    %v819 = vsel %vm813, %v806, 920167782
    %v820 = vsel %vm812, %v803, %v819
    %v821 = vsel %vm811, %v818, %v820
    %v822 = vsel %vm810, %v800, %v803
    %v823 = vsel %vm813, %v809, 1326507024
    %v824 = vsel %vm812, %v806, %v823
    %v825 = vsel %vm811, %v822, %v824
    %v826 = vshll.u32 %v786, 8
    %v827 = vmul.u32.u64.compose %v826, %v825
    %v828 = vextract.low.u32 %v827
    %v829 = vextract.high.u32 %v827
    %v830 = vmul.u32.u64.compose %v826, %v821
    %v831 = vextract.low.u32 %v830
    %v832 = vextract.high.u32 %v830
    %v833 = vmul.u32 %v826, %v817
    %v834 = vadd.s32 %v829, %v831
    %vm835 = vc.u32 %v829, %v831
    %v836 = vadd.s32 %v832, 1
    %v837 = vsel %vm835, %v836, %v832
    %v838 = vadd.s32 %v833, %v837
    %v839 = vadd.s32 %v838, 536870912
    %v840 = vshrl.u32 %v839, 30
    %v841 = vshll.u32 %v840, 30
    %v842 = vsub.s32 %v838, %v841
    %vm843 = vcmp.lt.s32.totalorder %v842, 0
    %v844 = vsub.s32 0, %v842
    %v845 = vsel %vm843, %v844, %v842
    %v846 = vclz %v845
    %v847 = vsub.s32 %v846, 2
    %vm848 = vcmp.gt.s32.totalorder 0, %v847
    %v849 = vsel %vm848, 0, %v847
    %v850 = vsub.s32 32, %v849
    %v851 = vshll.u32 %v842, %v849
    %v852 = vshrl.u32 %v834, %v850
    %v853 = vor.u32 %v851, %v852
    %v854 = vsub.s32 4294967266, %v849
    %v855 = vadd.s32 %v854, 127
    %v856 = vshll.u32 %v855, 23
    %v857 = vor.u32 4788187, %v856
    %v858 = vand.u32 2147483647, %v857
    %v860 = vcvt.s32.f32 %v853
    %v861 = vmul.f32 %v860, %v858
    %v862 = vxor.u32 %v861, 2147483648
    %v863 = vsel %vm780, %v862, %v861
    %v864 = vsub.s32 4, %v840
    %v865 = vsel %vm780, %v864, %v840
    %v866 = vsel %vm779, %v48, %v863
    %v867 = vsel %vm779, 0, %v865
    %v868 = vcosq.f32.pop %v866
    %v869 = vsinq.f32.pop %v866
    %vm870 = vweird.f32 %v48
    %v871 = vand.u32 %v867, 3
    %vm872 = vcmp.lt.s32.totalorder %v871, 2
    %vm873 = vcmp.eq.s32.totalorder %v871, 0
    %v874 = vxor.u32 %v869, 2147483648
    %v875 = vsel %vm873, %v868, %v874
    %vm876 = vcmp.eq.s32.totalorder %v871, 2
    %v877 = vxor.u32 %v868, 2147483648
    %v878 = vsel %vm876, %v877, %v869
    %v879 = vsel %vm872, %v875, %v878
    %v880 = vsel %vm870, nan, %v879
    %v881 = vand.u32 2147483647, %v49
    %vm882 = vcmp.le.f32.partialorder %v881, 0.7853982
    %vm883 = vcmp.lt.s32.totalorder %v49, 0
    %v884 = vand.u32 %v49, 2139095040
    %v885 = vshrl.u32 %v884, 23
    %v886 = vsub.s32 %v885, 127
    %v887 = vand.u32 2147483647, %v49
    %v888 = vand.u32 %v887, 8388607
    %v889 = vor.u32 %v888, 8388608
    %v890 = vsub.s32 0, %v889
    %v891 = vadd.s32 %v886, 1
    %vm892 = vcmp.gt.s32.totalorder %v891, 0
    %v893 = vsel %vm892, %v891, 0
    %v894 = vshrl.u32 %v893, 5
    %v895 = vand.u32 %v893, 31
    %v896 = vsub.s32 32, %v895
    %v897 = vshrl.u32 683565275, %v896
    %v898 = vshll.u32 683565275, %v895
    %v899 = vshrl.u32 2475754826, %v896
    %v900 = vor.u32 %v898, %v899
    %v901 = vshll.u32 2475754826, %v895
    %v902 = vshrl.u32 2131351028, %v896
    %v903 = vor.u32 %v901, %v902
    %v904 = vshll.u32 2131351028, %v895
    %v905 = vshrl.u32 2102212464, %v896
    %v906 = vor.u32 %v904, %v905
    %v907 = vshll.u32 2102212464, %v895
    %v908 = vshrl.u32 920167782, %v896
    %v909 = vor.u32 %v907, %v908
    %v910 = vshll.u32 920167782, %v895
    %v911 = vshrl.u32 1326507024, %v896
    %v912 = vor.u32 %v910, %v911
    %vm913 = vcmp.lt.s32.totalorder %v894, 1
    %vm914 = vcmp.lt.s32.totalorder %v894, 2
    %vm915 = vcmp.lt.s32.totalorder %v894, 3
    %vm916 = vcmp.lt.s32.totalorder %v894, 4
    %v917 = vsel %vm913, %v897, %v900
    %v918 = vsel %vm916, %v906, 2102212464
    %v919 = vsel %vm915, %v903, %v918
    %v920 = vsel %vm914, %v917, %v919
    %v921 = vsel %vm913, %v900, %v903
    %v922 = vsel %vm916, %v909, 920167782
    %v923 = vsel %vm915, %v906, %v922
    %v924 = vsel %vm914, %v921, %v923
    %v925 = vsel %vm913, %v903, %v906
    %v926 = vsel %vm916, %v912, 1326507024
    %v927 = vsel %vm915, %v909, %v926
    %v928 = vsel %vm914, %v925, %v927
    %v929 = vshll.u32 %v889, 8
    %v930 = vmul.u32.u64.compose %v929, %v928
    %v931 = vextract.low.u32 %v930
    %v932 = vextract.high.u32 %v930
    %v933 = vmul.u32.u64.compose %v929, %v924
    %v934 = vextract.low.u32 %v933
    %v935 = vextract.high.u32 %v933
    %v936 = vmul.u32 %v929, %v920
    %v937 = vadd.s32 %v932, %v934
    %vm938 = vc.u32 %v932, %v934
    %v939 = vadd.s32 %v935, 1
    %v940 = vsel %vm938, %v939, %v935
    %v941 = vadd.s32 %v936, %v940
    %v942 = vadd.s32 %v941, 536870912
    %v943 = vshrl.u32 %v942, 30
    %v944 = vshll.u32 %v943, 30
    %v945 = vsub.s32 %v941, %v944
    %vm946 = vcmp.lt.s32.totalorder %v945, 0
    %v947 = vsub.s32 0, %v945
    %v948 = vsel %vm946, %v947, %v945
    %v949 = vclz %v948
    %v950 = vsub.s32 %v949, 2
    %vm951 = vcmp.gt.s32.totalorder 0, %v950
    %v952 = vsel %vm951, 0, %v950
    %v953 = vsub.s32 32, %v952
    %v954 = vshll.u32 %v945, %v952
    %v955 = vshrl.u32 %v937, %v953
    %v956 = vor.u32 %v954, %v955
    %v957 = vsub.s32 4294967266, %v952
    %v958 = vadd.s32 %v957, 127
    %v959 = vshll.u32 %v958, 23
    %v960 = vor.u32 4788187, %v959
    %v961 = vand.u32 2147483647, %v960
    %v963 = vcvt.s32.f32 %v956
    %v964 = vmul.f32 %v963, %v961
    %v965 = vxor.u32 %v964, 2147483648
    %v966 = vsel %vm883, %v965, %v964
    %v967 = vsub.s32 4, %v943
    %v968 = vsel %vm883, %v967, %v943
    %v969 = vsel %vm882, %v49, %v966
    %v970 = vsel %vm882, 0, %v968
    %v971 = vcosq.f32.pop %v969
    %v972 = vsinq.f32.pop %v969
    %vm973 = vweird.f32 %v49
    %v974 = vand.u32 %v970, 3
    %vm975 = vcmp.lt.s32.totalorder %v974, 2
    %vm976 = vcmp.eq.s32.totalorder %v974, 0
    %v977 = vxor.u32 %v972, 2147483648
    %v978 = vsel %vm976, %v971, %v977
    %vm979 = vcmp.eq.s32.totalorder %v974, 2
    %v980 = vxor.u32 %v971, 2147483648
    %v981 = vsel %vm979, %v980, %v972
    %v982 = vsel %vm975, %v978, %v981
    %v983 = vsel %vm973, nan, %v982
    %v984 = vand.u32 2147483647, %v50
    %vm985 = vcmp.le.f32.partialorder %v984, 0.7853982
    %vm986 = vcmp.lt.s32.totalorder %v50, 0
    %v987 = vand.u32 %v50, 2139095040
    %v988 = vshrl.u32 %v987, 23
    %v989 = vsub.s32 %v988, 127
    %v990 = vand.u32 2147483647, %v50
    %v991 = vand.u32 %v990, 8388607
    %v992 = vor.u32 %v991, 8388608
    %v993 = vsub.s32 0, %v992
    %v994 = vadd.s32 %v989, 1
    %vm995 = vcmp.gt.s32.totalorder %v994, 0
    %v996 = vsel %vm995, %v994, 0
    %v997 = vshrl.u32 %v996, 5
    %v998 = vand.u32 %v996, 31
    %v999 = vsub.s32 32, %v998
    %v1000 = vshrl.u32 683565275, %v999
    %v1001 = vshll.u32 683565275, %v998
    %v1002 = vshrl.u32 2475754826, %v999
    %v1003 = vor.u32 %v1001, %v1002
    %v1004 = vshll.u32 2475754826, %v998
    %v1005 = vshrl.u32 2131351028, %v999
    %v1006 = vor.u32 %v1004, %v1005
    %v1007 = vshll.u32 2131351028, %v998
    %v1008 = vshrl.u32 2102212464, %v999
    %v1009 = vor.u32 %v1007, %v1008
    %v1010 = vshll.u32 2102212464, %v998
    %v1011 = vshrl.u32 920167782, %v999
    %v1012 = vor.u32 %v1010, %v1011
    %v1013 = vshll.u32 920167782, %v998
    %v1014 = vshrl.u32 1326507024, %v999
    %v1015 = vor.u32 %v1013, %v1014
    %vm1016 = vcmp.lt.s32.totalorder %v997, 1
    %vm1017 = vcmp.lt.s32.totalorder %v997, 2
    %vm1018 = vcmp.lt.s32.totalorder %v997, 3
    %vm1019 = vcmp.lt.s32.totalorder %v997, 4
    %v1020 = vsel %vm1016, %v1000, %v1003
    %v1021 = vsel %vm1019, %v1009, 2102212464
    %v1022 = vsel %vm1018, %v1006, %v1021
    %v1023 = vsel %vm1017, %v1020, %v1022
    %v1024 = vsel %vm1016, %v1003, %v1006
    %v1025 = vsel %vm1019, %v1012, 920167782
    %v1026 = vsel %vm1018, %v1009, %v1025
    %v1027 = vsel %vm1017, %v1024, %v1026
    %v1028 = vsel %vm1016, %v1006, %v1009
    %v1029 = vsel %vm1019, %v1015, 1326507024
    %v1030 = vsel %vm1018, %v1012, %v1029
    %v1031 = vsel %vm1017, %v1028, %v1030
    %v1032 = vshll.u32 %v992, 8
    %v1033 = vmul.u32.u64.compose %v1032, %v1031
    %v1034 = vextract.low.u32 %v1033
    %v1035 = vextract.high.u32 %v1033
    %v1036 = vmul.u32.u64.compose %v1032, %v1027
    %v1037 = vextract.low.u32 %v1036
    %v1038 = vextract.high.u32 %v1036
    %v1039 = vmul.u32 %v1032, %v1023
    %v1040 = vadd.s32 %v1035, %v1037
    %vm1041 = vc.u32 %v1035, %v1037
    %v1042 = vadd.s32 %v1038, 1
    %v1043 = vsel %vm1041, %v1042, %v1038
    %v1044 = vadd.s32 %v1039, %v1043
    %v1045 = vadd.s32 %v1044, 536870912
    %v1046 = vshrl.u32 %v1045, 30
    %v1047 = vshll.u32 %v1046, 30
    %v1048 = vsub.s32 %v1044, %v1047
    %vm1049 = vcmp.lt.s32.totalorder %v1048, 0
    %v1050 = vsub.s32 0, %v1048
    %v1051 = vsel %vm1049, %v1050, %v1048
    %v1052 = vclz %v1051
    %v1053 = vsub.s32 %v1052, 2
    %vm1054 = vcmp.gt.s32.totalorder 0, %v1053
    %v1055 = vsel %vm1054, 0, %v1053
    %v1056 = vsub.s32 32, %v1055
    %v1057 = vshll.u32 %v1048, %v1055
    %v1058 = vshrl.u32 %v1040, %v1056
    %v1059 = vor.u32 %v1057, %v1058
    %v1060 = vsub.s32 4294967266, %v1055
    %v1061 = vadd.s32 %v1060, 127
    %v1062 = vshll.u32 %v1061, 23
    %v1063 = vor.u32 4788187, %v1062
    %v1064 = vand.u32 2147483647, %v1063
    %v1066 = vcvt.s32.f32 %v1059
    %v1067 = vmul.f32 %v1066, %v1064
    %v1068 = vxor.u32 %v1067, 2147483648
    %v1069 = vsel %vm986, %v1068, %v1067
    %v1070 = vsub.s32 4, %v1046
    %v1071 = vsel %vm986, %v1070, %v1046
    %v1072 = vsel %vm985, %v50, %v1069
    %v1073 = vsel %vm985, 0, %v1071
    %v1074 = vcosq.f32.pop %v1072
    %v1075 = vsinq.f32.pop %v1072
    %vm1076 = vweird.f32 %v50
    %v1077 = vand.u32 %v1073, 3
    %vm1078 = vcmp.lt.s32.totalorder %v1077, 2
    %vm1079 = vcmp.eq.s32.totalorder %v1077, 0
    %v1080 = vxor.u32 %v1075, 2147483648
    %v1081 = vsel %vm1079, %v1074, %v1080
    %vm1082 = vcmp.eq.s32.totalorder %v1077, 2
    %v1083 = vxor.u32 %v1074, 2147483648
    %v1084 = vsel %vm1082, %v1083, %v1075
    %v1085 = vsel %vm1078, %v1081, %v1084
    %v1086 = vsel %vm1076, nan, %v1085
    %v1087 = vand.u32 2147483647, %v51
    %vm1088 = vcmp.le.f32.partialorder %v1087, 0.7853982
    %vm1089 = vcmp.lt.s32.totalorder %v51, 0
    %v1090 = vand.u32 %v51, 2139095040
    %v1091 = vshrl.u32 %v1090, 23
    %v1092 = vsub.s32 %v1091, 127
    %v1093 = vand.u32 2147483647, %v51
    %v1094 = vand.u32 %v1093, 8388607
    %v1095 = vor.u32 %v1094, 8388608
    %v1096 = vsub.s32 0, %v1095
    %v1097 = vadd.s32 %v1092, 1
    %vm1098 = vcmp.gt.s32.totalorder %v1097, 0
    %v1099 = vsel %vm1098, %v1097, 0
    %v1100 = vshrl.u32 %v1099, 5
    %v1101 = vand.u32 %v1099, 31
    %v1102 = vsub.s32 32, %v1101
    %v1103 = vshrl.u32 683565275, %v1102
    %v1104 = vshll.u32 683565275, %v1101
    %v1105 = vshrl.u32 2475754826, %v1102
    %v1106 = vor.u32 %v1104, %v1105
    %v1107 = vshll.u32 2475754826, %v1101
    %v1108 = vshrl.u32 2131351028, %v1102
    %v1109 = vor.u32 %v1107, %v1108
    %v1110 = vshll.u32 2131351028, %v1101
    %v1111 = vshrl.u32 2102212464, %v1102
    %v1112 = vor.u32 %v1110, %v1111
    %v1113 = vshll.u32 2102212464, %v1101
    %v1114 = vshrl.u32 920167782, %v1102
    %v1115 = vor.u32 %v1113, %v1114
    %v1116 = vshll.u32 920167782, %v1101
    %v1117 = vshrl.u32 1326507024, %v1102
    %v1118 = vor.u32 %v1116, %v1117
    %vm1119 = vcmp.lt.s32.totalorder %v1100, 1
    %vm1120 = vcmp.lt.s32.totalorder %v1100, 2
    %vm1121 = vcmp.lt.s32.totalorder %v1100, 3
    %vm1122 = vcmp.lt.s32.totalorder %v1100, 4
    %v1123 = vsel %vm1119, %v1103, %v1106
    %v1124 = vsel %vm1122, %v1112, 2102212464
    %v1125 = vsel %vm1121, %v1109, %v1124
    %v1126 = vsel %vm1120, %v1123, %v1125
    %v1127 = vsel %vm1119, %v1106, %v1109
    %v1128 = vsel %vm1122, %v1115, 920167782
    %v1129 = vsel %vm1121, %v1112, %v1128
    %v1130 = vsel %vm1120, %v1127, %v1129
    %v1131 = vsel %vm1119, %v1109, %v1112
    %v1132 = vsel %vm1122, %v1118, 1326507024
    %v1133 = vsel %vm1121, %v1115, %v1132
    %v1134 = vsel %vm1120, %v1131, %v1133
    %v1135 = vshll.u32 %v1095, 8
    %v1136 = vmul.u32.u64.compose %v1135, %v1134
    %v1137 = vextract.low.u32 %v1136
    %v1138 = vextract.high.u32 %v1136
    %v1139 = vmul.u32.u64.compose %v1135, %v1130
    %v1140 = vextract.low.u32 %v1139
    %v1141 = vextract.high.u32 %v1139
    %v1142 = vmul.u32 %v1135, %v1126
    %v1143 = vadd.s32 %v1138, %v1140
    %vm1144 = vc.u32 %v1138, %v1140
    %v1145 = vadd.s32 %v1141, 1
    %v1146 = vsel %vm1144, %v1145, %v1141
    %v1147 = vadd.s32 %v1142, %v1146
    %v1148 = vadd.s32 %v1147, 536870912
    %v1149 = vshrl.u32 %v1148, 30
    %v1150 = vshll.u32 %v1149, 30
    %v1151 = vsub.s32 %v1147, %v1150
    %vm1152 = vcmp.lt.s32.totalorder %v1151, 0
    %v1153 = vsub.s32 0, %v1151
    %v1154 = vsel %vm1152, %v1153, %v1151
    %v1155 = vclz %v1154
    %v1156 = vsub.s32 %v1155, 2
    %vm1157 = vcmp.gt.s32.totalorder 0, %v1156
    %v1158 = vsel %vm1157, 0, %v1156
    %v1159 = vsub.s32 32, %v1158
    %v1160 = vshll.u32 %v1151, %v1158
    %v1161 = vshrl.u32 %v1143, %v1159
    %v1162 = vor.u32 %v1160, %v1161
    %v1163 = vsub.s32 4294967266, %v1158
    %v1164 = vadd.s32 %v1163, 127
    %v1165 = vshll.u32 %v1164, 23
    %v1166 = vor.u32 4788187, %v1165
    %v1167 = vand.u32 2147483647, %v1166
    %v1169 = vcvt.s32.f32 %v1162
    %v1170 = vmul.f32 %v1169, %v1167
    %v1171 = vxor.u32 %v1170, 2147483648
    %v1172 = vsel %vm1089, %v1171, %v1170
    %v1173 = vsub.s32 4, %v1149
    %v1174 = vsel %vm1089, %v1173, %v1149
    %v1175 = vsel %vm1088, %v51, %v1172
    %v1176 = vsel %vm1088, 0, %v1174
    %v1177 = vcosq.f32.pop %v1175
    %v1178 = vsinq.f32.pop %v1175
    %vm1179 = vweird.f32 %v51
    %v1180 = vand.u32 %v1176, 3
    %vm1181 = vcmp.lt.s32.totalorder %v1180, 2
    %vm1182 = vcmp.eq.s32.totalorder %v1180, 0
    %v1183 = vxor.u32 %v1178, 2147483648
    %v1184 = vsel %vm1182, %v1177, %v1183
    %vm1185 = vcmp.eq.s32.totalorder %v1180, 2
    %v1186 = vxor.u32 %v1177, 2147483648
    %v1187 = vsel %vm1185, %v1186, %v1178
    %v1188 = vsel %vm1181, %v1184, %v1187
    %v1189 = vsel %vm1179, nan, %v1188
    %v1190 = vand.u32 2147483647, %v52
    %vm1191 = vcmp.le.f32.partialorder %v1190, 0.7853982
    %vm1192 = vcmp.lt.s32.totalorder %v52, 0
    %v1193 = vand.u32 %v52, 2139095040
    %v1194 = vshrl.u32 %v1193, 23
    %v1195 = vsub.s32 %v1194, 127
    %v1196 = vand.u32 2147483647, %v52
    %v1197 = vand.u32 %v1196, 8388607
    %v1198 = vor.u32 %v1197, 8388608
    %v1199 = vsub.s32 0, %v1198
    %v1200 = vadd.s32 %v1195, 1
    %vm1201 = vcmp.gt.s32.totalorder %v1200, 0
    %v1202 = vsel %vm1201, %v1200, 0
    %v1203 = vshrl.u32 %v1202, 5
    %v1204 = vand.u32 %v1202, 31
    %v1205 = vsub.s32 32, %v1204
    %v1206 = vshrl.u32 683565275, %v1205
    %v1207 = vshll.u32 683565275, %v1204
    %v1208 = vshrl.u32 2475754826, %v1205
    %v1209 = vor.u32 %v1207, %v1208
    %v1210 = vshll.u32 2475754826, %v1204
    %v1211 = vshrl.u32 2131351028, %v1205
    %v1212 = vor.u32 %v1210, %v1211
    %v1213 = vshll.u32 2131351028, %v1204
    %v1214 = vshrl.u32 2102212464, %v1205
    %v1215 = vor.u32 %v1213, %v1214
    %v1216 = vshll.u32 2102212464, %v1204
    %v1217 = vshrl.u32 920167782, %v1205
    %v1218 = vor.u32 %v1216, %v1217
    %v1219 = vshll.u32 920167782, %v1204
    %v1220 = vshrl.u32 1326507024, %v1205
    %v1221 = vor.u32 %v1219, %v1220
    %vm1222 = vcmp.lt.s32.totalorder %v1203, 1
    %vm1223 = vcmp.lt.s32.totalorder %v1203, 2
    %vm1224 = vcmp.lt.s32.totalorder %v1203, 3
    %vm1225 = vcmp.lt.s32.totalorder %v1203, 4
    %v1226 = vsel %vm1222, %v1206, %v1209
    %v1227 = vsel %vm1225, %v1215, 2102212464
    %v1228 = vsel %vm1224, %v1212, %v1227
    %v1229 = vsel %vm1223, %v1226, %v1228
    %v1230 = vsel %vm1222, %v1209, %v1212
    %v1231 = vsel %vm1225, %v1218, 920167782
    %v1232 = vsel %vm1224, %v1215, %v1231
    %v1233 = vsel %vm1223, %v1230, %v1232
    %v1234 = vsel %vm1222, %v1212, %v1215
    %v1235 = vsel %vm1225, %v1221, 1326507024
    %v1236 = vsel %vm1224, %v1218, %v1235
    %v1237 = vsel %vm1223, %v1234, %v1236
    %v1238 = vshll.u32 %v1198, 8
    %v1239 = vmul.u32.u64.compose %v1238, %v1237
    %v1240 = vextract.low.u32 %v1239
    %v1241 = vextract.high.u32 %v1239
    %v1242 = vmul.u32.u64.compose %v1238, %v1233
    %v1243 = vextract.low.u32 %v1242
    %v1244 = vextract.high.u32 %v1242
    %v1245 = vmul.u32 %v1238, %v1229
    %v1246 = vadd.s32 %v1241, %v1243
    %vm1247 = vc.u32 %v1241, %v1243
    %v1248 = vadd.s32 %v1244, 1
    %v1249 = vsel %vm1247, %v1248, %v1244
    %v1250 = vadd.s32 %v1245, %v1249
    %v1251 = vadd.s32 %v1250, 536870912
    %v1252 = vshrl.u32 %v1251, 30
    %v1253 = vshll.u32 %v1252, 30
    %v1254 = vsub.s32 %v1250, %v1253
    %vm1255 = vcmp.lt.s32.totalorder %v1254, 0
    %v1256 = vsub.s32 0, %v1254
    %v1257 = vsel %vm1255, %v1256, %v1254
    %v1258 = vclz %v1257
    %v1259 = vsub.s32 %v1258, 2
    %vm1260 = vcmp.gt.s32.totalorder 0, %v1259
    %v1261 = vsel %vm1260, 0, %v1259
    %v1262 = vsub.s32 32, %v1261
    %v1263 = vshll.u32 %v1254, %v1261
    %v1264 = vshrl.u32 %v1246, %v1262
    %v1265 = vor.u32 %v1263, %v1264
    %v1266 = vsub.s32 4294967266, %v1261
    %v1267 = vadd.s32 %v1266, 127
    %v1268 = vshll.u32 %v1267, 23
    %v1269 = vor.u32 4788187, %v1268
    %v1270 = vand.u32 2147483647, %v1269
    %v1272 = vcvt.s32.f32 %v1265
    %v1273 = vmul.f32 %v1272, %v1270
    %v1274 = vxor.u32 %v1273, 2147483648
    %v1275 = vsel %vm1192, %v1274, %v1273
    %v1276 = vsub.s32 4, %v1252
    %v1277 = vsel %vm1192, %v1276, %v1252
    %v1278 = vsel %vm1191, %v52, %v1275
    %v1279 = vsel %vm1191, 0, %v1277
    %v1280 = vcosq.f32.pop %v1278
    %v1281 = vsinq.f32.pop %v1278
    %vm1282 = vweird.f32 %v52
    %v1283 = vand.u32 %v1279, 3
    %vm1284 = vcmp.lt.s32.totalorder %v1283, 2
    %vm1285 = vcmp.eq.s32.totalorder %v1283, 0
    %v1286 = vxor.u32 %v1281, 2147483648
    %v1287 = vsel %vm1285, %v1280, %v1286
    %vm1288 = vcmp.eq.s32.totalorder %v1283, 2
    %v1289 = vxor.u32 %v1280, 2147483648
    %v1290 = vsel %vm1288, %v1289, %v1281
    %v1291 = vsel %vm1284, %v1287, %v1290
    %v1292 = vsel %vm1282, nan, %v1291
    %v1293 = vand.u32 2147483647, %v53
    %vm1294 = vcmp.le.f32.partialorder %v1293, 0.7853982
    %vm1295 = vcmp.lt.s32.totalorder %v53, 0
    %v1296 = vand.u32 %v53, 2139095040
    %v1297 = vshrl.u32 %v1296, 23
    %v1298 = vsub.s32 %v1297, 127
    %v1299 = vand.u32 2147483647, %v53
    %v1300 = vand.u32 %v1299, 8388607
    %v1301 = vor.u32 %v1300, 8388608
    %v1302 = vsub.s32 0, %v1301
    %v1303 = vadd.s32 %v1298, 1
    %vm1304 = vcmp.gt.s32.totalorder %v1303, 0
    %v1305 = vsel %vm1304, %v1303, 0
    %v1306 = vshrl.u32 %v1305, 5
    %v1307 = vand.u32 %v1305, 31
    %v1308 = vsub.s32 32, %v1307
    %v1309 = vshrl.u32 683565275, %v1308
    %v1310 = vshll.u32 683565275, %v1307
    %v1311 = vshrl.u32 2475754826, %v1308
    %v1312 = vor.u32 %v1310, %v1311
    %v1313 = vshll.u32 2475754826, %v1307
    %v1314 = vshrl.u32 2131351028, %v1308
    %v1315 = vor.u32 %v1313, %v1314
    %v1316 = vshll.u32 2131351028, %v1307
    %v1317 = vshrl.u32 2102212464, %v1308
    %v1318 = vor.u32 %v1316, %v1317
    %v1319 = vshll.u32 2102212464, %v1307
    %v1320 = vshrl.u32 920167782, %v1308
    %v1321 = vor.u32 %v1319, %v1320
    %v1322 = vshll.u32 920167782, %v1307
    %v1323 = vshrl.u32 1326507024, %v1308
    %v1324 = vor.u32 %v1322, %v1323
    %vm1325 = vcmp.lt.s32.totalorder %v1306, 1
    %vm1326 = vcmp.lt.s32.totalorder %v1306, 2
    %vm1327 = vcmp.lt.s32.totalorder %v1306, 3
    %vm1328 = vcmp.lt.s32.totalorder %v1306, 4
    %v1329 = vsel %vm1325, %v1309, %v1312
    %v1330 = vsel %vm1328, %v1318, 2102212464
    %v1331 = vsel %vm1327, %v1315, %v1330
    %v1332 = vsel %vm1326, %v1329, %v1331
    %v1333 = vsel %vm1325, %v1312, %v1315
    %v1334 = vsel %vm1328, %v1321, 920167782
    %v1335 = vsel %vm1327, %v1318, %v1334
    %v1336 = vsel %vm1326, %v1333, %v1335
    %v1337 = vsel %vm1325, %v1315, %v1318
    %v1338 = vsel %vm1328, %v1324, 1326507024
    %v1339 = vsel %vm1327, %v1321, %v1338
    %v1340 = vsel %vm1326, %v1337, %v1339
    %v1341 = vshll.u32 %v1301, 8
    %v1342 = vmul.u32.u64.compose %v1341, %v1340
    %v1343 = vextract.low.u32 %v1342
    %v1344 = vextract.high.u32 %v1342
    %v1345 = vmul.u32.u64.compose %v1341, %v1336
    %v1346 = vextract.low.u32 %v1345
    %v1347 = vextract.high.u32 %v1345
    %v1348 = vmul.u32 %v1341, %v1332
    %v1349 = vadd.s32 %v1344, %v1346
    %vm1350 = vc.u32 %v1344, %v1346
    %v1351 = vadd.s32 %v1347, 1
    %v1352 = vsel %vm1350, %v1351, %v1347
    %v1353 = vadd.s32 %v1348, %v1352
    %v1354 = vadd.s32 %v1353, 536870912
    %v1355 = vshrl.u32 %v1354, 30
    %v1356 = vshll.u32 %v1355, 30
    %v1357 = vsub.s32 %v1353, %v1356
    %vm1358 = vcmp.lt.s32.totalorder %v1357, 0
    %v1359 = vsub.s32 0, %v1357
    %v1360 = vsel %vm1358, %v1359, %v1357
    %v1361 = vclz %v1360
    %v1362 = vsub.s32 %v1361, 2
    %vm1363 = vcmp.gt.s32.totalorder 0, %v1362
    %v1364 = vsel %vm1363, 0, %v1362
    %v1365 = vsub.s32 32, %v1364
    %v1366 = vshll.u32 %v1357, %v1364
    %v1367 = vshrl.u32 %v1349, %v1365
    %v1368 = vor.u32 %v1366, %v1367
    %v1369 = vsub.s32 4294967266, %v1364
    %v1370 = vadd.s32 %v1369, 127
    %v1371 = vshll.u32 %v1370, 23
    %v1372 = vor.u32 4788187, %v1371
    %v1373 = vand.u32 2147483647, %v1372
    %v1375 = vcvt.s32.f32 %v1368
    %v1376 = vmul.f32 %v1375, %v1373
    %v1377 = vxor.u32 %v1376, 2147483648
    %v1378 = vsel %vm1295, %v1377, %v1376
    %v1379 = vsub.s32 4, %v1355
    %v1380 = vsel %vm1295, %v1379, %v1355
    %v1381 = vsel %vm1294, %v53, %v1378
    %v1382 = vsel %vm1294, 0, %v1380
    %v1383 = vcosq.f32.pop %v1381
    %v1384 = vsinq.f32.pop %v1381
    %vm1385 = vweird.f32 %v53
    %v1386 = vand.u32 %v1382, 3
    %vm1387 = vcmp.lt.s32.totalorder %v1386, 2
    %vm1388 = vcmp.eq.s32.totalorder %v1386, 0
    %v1389 = vxor.u32 %v1384, 2147483648
    %v1390 = vsel %vm1388, %v1383, %v1389
    %vm1391 = vcmp.eq.s32.totalorder %v1386, 2
    %v1392 = vxor.u32 %v1383, 2147483648
    %v1393 = vsel %vm1391, %v1392, %v1384
    %v1394 = vsel %vm1387, %v1390, %v1393
    %v1395 = vsel %vm1385, nan, %v1394
    %v1396 = vand.u32 2147483647, %v54
    %vm1397 = vcmp.le.f32.partialorder %v1396, 0.7853982
    %vm1398 = vcmp.lt.s32.totalorder %v54, 0
    %v1399 = vand.u32 %v54, 2139095040
    %v1400 = vshrl.u32 %v1399, 23
    %v1401 = vsub.s32 %v1400, 127
    %v1402 = vand.u32 2147483647, %v54
    %v1403 = vand.u32 %v1402, 8388607
    %v1404 = vor.u32 %v1403, 8388608
    %v1405 = vsub.s32 0, %v1404
    %v1406 = vadd.s32 %v1401, 1
    %vm1407 = vcmp.gt.s32.totalorder %v1406, 0
    %v1408 = vsel %vm1407, %v1406, 0
    %v1409 = vshrl.u32 %v1408, 5
    %v1410 = vand.u32 %v1408, 31
    %v1411 = vsub.s32 32, %v1410
    %v1412 = vshrl.u32 683565275, %v1411
    %v1413 = vshll.u32 683565275, %v1410
    %v1414 = vshrl.u32 2475754826, %v1411
    %v1415 = vor.u32 %v1413, %v1414
    %v1416 = vshll.u32 2475754826, %v1410
    %v1417 = vshrl.u32 2131351028, %v1411
    %v1418 = vor.u32 %v1416, %v1417
    %v1419 = vshll.u32 2131351028, %v1410
    %v1420 = vshrl.u32 2102212464, %v1411
    %v1421 = vor.u32 %v1419, %v1420
    %v1422 = vshll.u32 2102212464, %v1410
    %v1423 = vshrl.u32 920167782, %v1411
    %v1424 = vor.u32 %v1422, %v1423
    %v1425 = vshll.u32 920167782, %v1410
    %v1426 = vshrl.u32 1326507024, %v1411
    %v1427 = vor.u32 %v1425, %v1426
    %vm1428 = vcmp.lt.s32.totalorder %v1409, 1
    %vm1429 = vcmp.lt.s32.totalorder %v1409, 2
    %vm1430 = vcmp.lt.s32.totalorder %v1409, 3
    %vm1431 = vcmp.lt.s32.totalorder %v1409, 4
    %v1432 = vsel %vm1428, %v1412, %v1415
    %v1433 = vsel %vm1431, %v1421, 2102212464
    %v1434 = vsel %vm1430, %v1418, %v1433
    %v1435 = vsel %vm1429, %v1432, %v1434
    %v1436 = vsel %vm1428, %v1415, %v1418
    %v1437 = vsel %vm1431, %v1424, 920167782
    %v1438 = vsel %vm1430, %v1421, %v1437
    %v1439 = vsel %vm1429, %v1436, %v1438
    %v1440 = vsel %vm1428, %v1418, %v1421
    %v1441 = vsel %vm1431, %v1427, 1326507024
    %v1442 = vsel %vm1430, %v1424, %v1441
    %v1443 = vsel %vm1429, %v1440, %v1442
    %v1444 = vshll.u32 %v1404, 8
    %v1445 = vmul.u32.u64.compose %v1444, %v1443
    %v1446 = vextract.low.u32 %v1445
    %v1447 = vextract.high.u32 %v1445
    %v1448 = vmul.u32.u64.compose %v1444, %v1439
    %v1449 = vextract.low.u32 %v1448
    %v1450 = vextract.high.u32 %v1448
    %v1451 = vmul.u32 %v1444, %v1435
    %v1452 = vadd.s32 %v1447, %v1449
    %vm1453 = vc.u32 %v1447, %v1449
    %v1454 = vadd.s32 %v1450, 1
    %v1455 = vsel %vm1453, %v1454, %v1450
    %v1456 = vadd.s32 %v1451, %v1455
    %v1457 = vadd.s32 %v1456, 536870912
    %v1458 = vshrl.u32 %v1457, 30
    %v1459 = vshll.u32 %v1458, 30
    %v1460 = vsub.s32 %v1456, %v1459
    %vm1461 = vcmp.lt.s32.totalorder %v1460, 0
    %v1462 = vsub.s32 0, %v1460
    %v1463 = vsel %vm1461, %v1462, %v1460
    %v1464 = vclz %v1463
    %v1465 = vsub.s32 %v1464, 2
    %vm1466 = vcmp.gt.s32.totalorder 0, %v1465
    %v1467 = vsel %vm1466, 0, %v1465
    %v1468 = vsub.s32 32, %v1467
    %v1469 = vshll.u32 %v1460, %v1467
    %v1470 = vshrl.u32 %v1452, %v1468
    %v1471 = vor.u32 %v1469, %v1470
    %v1472 = vsub.s32 4294967266, %v1467
    %v1473 = vadd.s32 %v1472, 127
    %v1474 = vshll.u32 %v1473, 23
    %v1475 = vor.u32 4788187, %v1474
    %v1476 = vand.u32 2147483647, %v1475
    %v1478 = vcvt.s32.f32 %v1471
    %v1479 = vmul.f32 %v1478, %v1476
    %v1480 = vxor.u32 %v1479, 2147483648
    %v1481 = vsel %vm1398, %v1480, %v1479
    %v1482 = vsub.s32 4, %v1458
    %v1483 = vsel %vm1398, %v1482, %v1458
    %v1484 = vsel %vm1397, %v54, %v1481
    %v1485 = vsel %vm1397, 0, %v1483
    %v1486 = vcosq.f32.pop %v1484
    %v1487 = vsinq.f32.pop %v1484
    %vm1488 = vweird.f32 %v54
    %v1489 = vand.u32 %v1485, 3
    %vm1490 = vcmp.lt.s32.totalorder %v1489, 2
    %vm1491 = vcmp.eq.s32.totalorder %v1489, 0
    %v1492 = vxor.u32 %v1487, 2147483648
    %v1493 = vsel %vm1491, %v1486, %v1492
    %vm1494 = vcmp.eq.s32.totalorder %v1489, 2
    %v1495 = vxor.u32 %v1486, 2147483648
    %v1496 = vsel %vm1494, %v1495, %v1487
    %v1497 = vsel %vm1490, %v1493, %v1496
    %v1498 = vsel %vm1488, nan, %v1497
    %v1499 = vand.u32 2147483647, %v55
    %vm1500 = vcmp.le.f32.partialorder %v1499, 0.7853982
    %vm1501 = vcmp.lt.s32.totalorder %v55, 0
    %v1502 = vand.u32 %v55, 2139095040
    %v1503 = vshrl.u32 %v1502, 23
    %v1504 = vsub.s32 %v1503, 127
    %v1505 = vand.u32 2147483647, %v55
    %v1506 = vand.u32 %v1505, 8388607
    %v1507 = vor.u32 %v1506, 8388608
    %v1508 = vsub.s32 0, %v1507
    %v1509 = vadd.s32 %v1504, 1
    %vm1510 = vcmp.gt.s32.totalorder %v1509, 0
    %v1511 = vsel %vm1510, %v1509, 0
    %v1512 = vshrl.u32 %v1511, 5
    %v1513 = vand.u32 %v1511, 31
    %v1514 = vsub.s32 32, %v1513
    %v1515 = vshrl.u32 683565275, %v1514
    %v1516 = vshll.u32 683565275, %v1513
    %v1517 = vshrl.u32 2475754826, %v1514
    %v1518 = vor.u32 %v1516, %v1517
    %v1519 = vshll.u32 2475754826, %v1513
    %v1520 = vshrl.u32 2131351028, %v1514
    %v1521 = vor.u32 %v1519, %v1520
    %v1522 = vshll.u32 2131351028, %v1513
    %v1523 = vshrl.u32 2102212464, %v1514
    %v1524 = vor.u32 %v1522, %v1523
    %v1525 = vshll.u32 2102212464, %v1513
    %v1526 = vshrl.u32 920167782, %v1514
    %v1527 = vor.u32 %v1525, %v1526
    %v1528 = vshll.u32 920167782, %v1513
    %v1529 = vshrl.u32 1326507024, %v1514
    %v1530 = vor.u32 %v1528, %v1529
    %vm1531 = vcmp.lt.s32.totalorder %v1512, 1
    %vm1532 = vcmp.lt.s32.totalorder %v1512, 2
    %vm1533 = vcmp.lt.s32.totalorder %v1512, 3
    %vm1534 = vcmp.lt.s32.totalorder %v1512, 4
    %v1535 = vsel %vm1531, %v1515, %v1518
    %v1536 = vsel %vm1534, %v1524, 2102212464
    %v1537 = vsel %vm1533, %v1521, %v1536
    %v1538 = vsel %vm1532, %v1535, %v1537
    %v1539 = vsel %vm1531, %v1518, %v1521
    %v1540 = vsel %vm1534, %v1527, 920167782
    %v1541 = vsel %vm1533, %v1524, %v1540
    %v1542 = vsel %vm1532, %v1539, %v1541
    %v1543 = vsel %vm1531, %v1521, %v1524
    %v1544 = vsel %vm1534, %v1530, 1326507024
    %v1545 = vsel %vm1533, %v1527, %v1544
    %v1546 = vsel %vm1532, %v1543, %v1545
    %v1547 = vshll.u32 %v1507, 8
    %v1548 = vmul.u32.u64.compose %v1547, %v1546
    %v1549 = vextract.low.u32 %v1548
    %v1550 = vextract.high.u32 %v1548
    %v1551 = vmul.u32.u64.compose %v1547, %v1542
    %v1552 = vextract.low.u32 %v1551
    %v1553 = vextract.high.u32 %v1551
    %v1554 = vmul.u32 %v1547, %v1538
    %v1555 = vadd.s32 %v1550, %v1552
    %vm1556 = vc.u32 %v1550, %v1552
    %v1557 = vadd.s32 %v1553, 1
    %v1558 = vsel %vm1556, %v1557, %v1553
    %v1559 = vadd.s32 %v1554, %v1558
    %v1560 = vadd.s32 %v1559, 536870912
    %v1561 = vshrl.u32 %v1560, 30
    %v1562 = vshll.u32 %v1561, 30
    %v1563 = vsub.s32 %v1559, %v1562
    %vm1564 = vcmp.lt.s32.totalorder %v1563, 0
    %v1565 = vsub.s32 0, %v1563
    %v1566 = vsel %vm1564, %v1565, %v1563
    %v1567 = vclz %v1566
    %v1568 = vsub.s32 %v1567, 2
    %vm1569 = vcmp.gt.s32.totalorder 0, %v1568
    %v1570 = vsel %vm1569, 0, %v1568
    %v1571 = vsub.s32 32, %v1570
    %v1572 = vshll.u32 %v1563, %v1570
    %v1573 = vshrl.u32 %v1555, %v1571
    %v1574 = vor.u32 %v1572, %v1573
    %v1575 = vsub.s32 4294967266, %v1570
    %v1576 = vadd.s32 %v1575, 127
    %v1577 = vshll.u32 %v1576, 23
    %v1578 = vor.u32 4788187, %v1577
    %v1579 = vand.u32 2147483647, %v1578
    %v1581 = vcvt.s32.f32 %v1574
    %v1582 = vmul.f32 %v1581, %v1579
    %v1583 = vxor.u32 %v1582, 2147483648
    %v1584 = vsel %vm1501, %v1583, %v1582
    %v1585 = vsub.s32 4, %v1561
    %v1586 = vsel %vm1501, %v1585, %v1561
    %v1587 = vsel %vm1500, %v55, %v1584
    %v1588 = vsel %vm1500, 0, %v1586
    %v1589 = vcosq.f32.pop %v1587
    %v1590 = vsinq.f32.pop %v1587
    %vm1591 = vweird.f32 %v55
    %v1592 = vand.u32 %v1588, 3
    %vm1593 = vcmp.lt.s32.totalorder %v1592, 2
    %vm1594 = vcmp.eq.s32.totalorder %v1592, 0
    %v1595 = vxor.u32 %v1590, 2147483648
    %v1596 = vsel %vm1594, %v1589, %v1595
    %vm1597 = vcmp.eq.s32.totalorder %v1592, 2
    %v1598 = vxor.u32 %v1589, 2147483648
    %v1599 = vsel %vm1597, %v1598, %v1590
    %v1600 = vsel %vm1593, %v1596, %v1599
    %v1601 = vsel %vm1591, nan, %v1600
    %v1602 = vand.u32 2147483647, %v56
    %vm1603 = vcmp.le.f32.partialorder %v1602, 0.7853982
    %vm1604 = vcmp.lt.s32.totalorder %v56, 0
    %v1605 = vand.u32 %v56, 2139095040
    %v1606 = vshrl.u32 %v1605, 23
    %v1607 = vsub.s32 %v1606, 127
    %v1608 = vand.u32 2147483647, %v56
    %v1609 = vand.u32 %v1608, 8388607
    %v1610 = vor.u32 %v1609, 8388608
    %v1611 = vsub.s32 0, %v1610
    %v1612 = vadd.s32 %v1607, 1
    %vm1613 = vcmp.gt.s32.totalorder %v1612, 0
    %v1614 = vsel %vm1613, %v1612, 0
    %v1615 = vshrl.u32 %v1614, 5
    %v1616 = vand.u32 %v1614, 31
    %v1617 = vsub.s32 32, %v1616
    %v1618 = vshrl.u32 683565275, %v1617
    %v1619 = vshll.u32 683565275, %v1616
    %v1620 = vshrl.u32 2475754826, %v1617
    %v1621 = vor.u32 %v1619, %v1620
    %v1622 = vshll.u32 2475754826, %v1616
    %v1623 = vshrl.u32 2131351028, %v1617
    %v1624 = vor.u32 %v1622, %v1623
    %v1625 = vshll.u32 2131351028, %v1616
    %v1626 = vshrl.u32 2102212464, %v1617
    %v1627 = vor.u32 %v1625, %v1626
    %v1628 = vshll.u32 2102212464, %v1616
    %v1629 = vshrl.u32 920167782, %v1617
    %v1630 = vor.u32 %v1628, %v1629
    %v1631 = vshll.u32 920167782, %v1616
    %v1632 = vshrl.u32 1326507024, %v1617
    %v1633 = vor.u32 %v1631, %v1632
    %vm1634 = vcmp.lt.s32.totalorder %v1615, 1
    %vm1635 = vcmp.lt.s32.totalorder %v1615, 2
    %vm1636 = vcmp.lt.s32.totalorder %v1615, 3
    %vm1637 = vcmp.lt.s32.totalorder %v1615, 4
    %v1638 = vsel %vm1634, %v1618, %v1621
    %v1639 = vsel %vm1637, %v1627, 2102212464
    %v1640 = vsel %vm1636, %v1624, %v1639
    %v1641 = vsel %vm1635, %v1638, %v1640
    %v1642 = vsel %vm1634, %v1621, %v1624
    %v1643 = vsel %vm1637, %v1630, 920167782
    %v1644 = vsel %vm1636, %v1627, %v1643
    %v1645 = vsel %vm1635, %v1642, %v1644
    %v1646 = vsel %vm1634, %v1624, %v1627
    %v1647 = vsel %vm1637, %v1633, 1326507024
    %v1648 = vsel %vm1636, %v1630, %v1647
    %v1649 = vsel %vm1635, %v1646, %v1648
    %v1650 = vshll.u32 %v1610, 8
    %v1651 = vmul.u32.u64.compose %v1650, %v1649
    %v1652 = vextract.low.u32 %v1651
    %v1653 = vextract.high.u32 %v1651
    %v1654 = vmul.u32.u64.compose %v1650, %v1645
    %v1655 = vextract.low.u32 %v1654
    %v1656 = vextract.high.u32 %v1654
    %v1657 = vmul.u32 %v1650, %v1641
    %v1658 = vadd.s32 %v1653, %v1655
    %vm1659 = vc.u32 %v1653, %v1655
    %v1660 = vadd.s32 %v1656, 1
    %v1661 = vsel %vm1659, %v1660, %v1656
    %v1662 = vadd.s32 %v1657, %v1661
    %v1663 = vadd.s32 %v1662, 536870912
    %v1664 = vshrl.u32 %v1663, 30
    %v1665 = vshll.u32 %v1664, 30
    %v1666 = vsub.s32 %v1662, %v1665
    %vm1667 = vcmp.lt.s32.totalorder %v1666, 0
    %v1668 = vsub.s32 0, %v1666
    %v1669 = vsel %vm1667, %v1668, %v1666
    %v1670 = vclz %v1669
    %v1671 = vsub.s32 %v1670, 2
    %vm1672 = vcmp.gt.s32.totalorder 0, %v1671
    %v1673 = vsel %vm1672, 0, %v1671
    %v1674 = vsub.s32 32, %v1673
    %v1675 = vshll.u32 %v1666, %v1673
    %v1676 = vshrl.u32 %v1658, %v1674
    %v1677 = vor.u32 %v1675, %v1676
    %v1678 = vsub.s32 4294967266, %v1673
    %v1679 = vadd.s32 %v1678, 127
    %v1680 = vshll.u32 %v1679, 23
    %v1681 = vor.u32 4788187, %v1680
    %v1682 = vand.u32 2147483647, %v1681
    %v1684 = vcvt.s32.f32 %v1677
    %v1685 = vmul.f32 %v1684, %v1682
    %v1686 = vxor.u32 %v1685, 2147483648
    %v1687 = vsel %vm1604, %v1686, %v1685
    %v1688 = vsub.s32 4, %v1664
    %v1689 = vsel %vm1604, %v1688, %v1664
    %v1690 = vsel %vm1603, %v56, %v1687
    %v1691 = vsel %vm1603, 0, %v1689
    %v1692 = vcosq.f32.pop %v1690
    %v1693 = vsinq.f32.pop %v1690
    %vm1694 = vweird.f32 %v56
    %v1695 = vand.u32 %v1691, 3
    %vm1696 = vcmp.lt.s32.totalorder %v1695, 2
    %vm1697 = vcmp.eq.s32.totalorder %v1695, 0
    %v1698 = vxor.u32 %v1693, 2147483648
    %v1699 = vsel %vm1697, %v1692, %v1698
    %vm1700 = vcmp.eq.s32.totalorder %v1695, 2
    %v1701 = vxor.u32 %v1692, 2147483648
    %v1702 = vsel %vm1700, %v1701, %v1693
    %v1703 = vsel %vm1696, %v1699, %v1702
    %v1704 = vsel %vm1694, nan, %v1703
    %v1705 = vmul.f32 %v159, 2.0
    %v1706 = vmul.f32 %v262, 2.0
    %v1707 = vmul.f32 %v365, 2.0
    %v1708 = vmul.f32 %v468, 2.0
    %v1709 = vmul.f32 %v571, 2.0
    %v1710 = vmul.f32 %v674, 2.0
    %v1711 = vmul.f32 %v777, 2.0
    %v1712 = vmul.f32 %v880, 2.0
    %v1713 = vmul.f32 %v983, 2.0
    %v1714 = vmul.f32 %v1086, 2.0
    %v1715 = vmul.f32 %v1189, 2.0
    %v1716 = vmul.f32 %v1292, 2.0
    %v1717 = vmul.f32 %v1395, 2.0
    %v1718 = vmul.f32 %v1498, 2.0
    %v1719 = vmul.f32 %v1601, 2.0
    %v1720 = vmul.f32 %v1704, 2.0
    %v1721 = vmul.f32 %v1705, %v159
    %v1722 = vmul.f32 %v1706, %v262
    %v1723 = vmul.f32 %v1707, %v365
    %v1724 = vmul.f32 %v1708, %v468
    %v1725 = vmul.f32 %v1709, %v571
    %v1726 = vmul.f32 %v1710, %v674
    %v1727 = vmul.f32 %v1711, %v777
    %v1728 = vmul.f32 %v1712, %v880
    %v1729 = vmul.f32 %v1713, %v983
    %v1730 = vmul.f32 %v1714, %v1086
    %v1731 = vmul.f32 %v1715, %v1189
    %v1732 = vmul.f32 %v1716, %v1292
    %v1733 = vmul.f32 %v1717, %v1395
    %v1734 = vmul.f32 %v1718, %v1498
    %v1735 = vmul.f32 %v1719, %v1601
    %v1736 = vmul.f32 %v1720, %v1704
    %v1737 = vsub.f32 %v1721, 1.0
    %v1738 = vsub.f32 %v1722, 1.0
    %v1739 = vsub.f32 %v1723, 1.0
    %v1740 = vsub.f32 %v1724, 1.0
    %v1741 = vsub.f32 %v1725, 1.0
    %v1742 = vsub.f32 %v1726, 1.0
    %v1743 = vsub.f32 %v1727, 1.0
    %v1744 = vsub.f32 %v1728, 1.0
    %v1745 = vsub.f32 %v1729, 1.0
    %v1746 = vsub.f32 %v1730, 1.0
    %v1747 = vsub.f32 %v1731, 1.0
    %v1748 = vsub.f32 %v1732, 1.0
    %v1749 = vsub.f32 %v1733, 1.0
    %v1750 = vsub.f32 %v1734, 1.0
    %v1751 = vsub.f32 %v1735, 1.0
    %v1752 = vsub.f32 %v1736, 1.0
    %v1753 = vadd.f32 %v159, %v1737
    %v1754 = vadd.f32 %v262, %v1738
    %v1755 = vadd.f32 %v365, %v1739
    %v1756 = vadd.f32 %v468, %v1740
    %v1757 = vadd.f32 %v571, %v1741
    %v1758 = vadd.f32 %v674, %v1742
    %v1759 = vadd.f32 %v777, %v1743
    %v1760 = vadd.f32 %v880, %v1744
    %v1761 = vadd.f32 %v983, %v1745
    %v1762 = vadd.f32 %v1086, %v1746
    %v1763 = vadd.f32 %v1189, %v1747
    %v1764 = vadd.f32 %v1292, %v1748
    %v1765 = vadd.f32 %v1395, %v1749
    %v1766 = vadd.f32 %v1498, %v1750
    %v1767 = vadd.f32 %v1601, %v1751
    %v1768 = vadd.f32 %v1704, %v1752
    %v1769 = vmul.f32 %v1705, %v1737
    %v1770 = vmul.f32 %v1706, %v1738
    %v1771 = vmul.f32 %v1707, %v1739
    %v1772 = vmul.f32 %v1708, %v1740
    %v1773 = vmul.f32 %v1709, %v1741
    %v1774 = vmul.f32 %v1710, %v1742
    %v1775 = vmul.f32 %v1711, %v1743
    %v1776 = vmul.f32 %v1712, %v1744
    %v1777 = vmul.f32 %v1713, %v1745
    %v1778 = vmul.f32 %v1714, %v1746
    %v1779 = vmul.f32 %v1715, %v1747
    %v1780 = vmul.f32 %v1716, %v1748
    %v1781 = vmul.f32 %v1717, %v1749
    %v1782 = vmul.f32 %v1718, %v1750
    %v1783 = vmul.f32 %v1719, %v1751
    %v1784 = vmul.f32 %v1720, %v1752
    %v1785 = vsub.f32 %v1769, %v159
    %v1786 = vsub.f32 %v1770, %v262
    %v1787 = vsub.f32 %v1771, %v365
    %v1788 = vsub.f32 %v1772, %v468
    %v1789 = vsub.f32 %v1773, %v571
    %v1790 = vsub.f32 %v1774, %v674
    %v1791 = vsub.f32 %v1775, %v777
    %v1792 = vsub.f32 %v1776, %v880
    %v1793 = vsub.f32 %v1777, %v983
    %v1794 = vsub.f32 %v1778, %v1086
    %v1795 = vsub.f32 %v1779, %v1189
    %v1796 = vsub.f32 %v1780, %v1292
    %v1797 = vsub.f32 %v1781, %v1395
    %v1798 = vsub.f32 %v1782, %v1498
    %v1799 = vsub.f32 %v1783, %v1601
    %v1800 = vsub.f32 %v1784, %v1704
    %v1801 = vadd.f32 %v1753, %v1785
    %v1802 = vadd.f32 %v1754, %v1786
    %v1803 = vadd.f32 %v1755, %v1787
    %v1804 = vadd.f32 %v1756, %v1788
    %v1805 = vadd.f32 %v1757, %v1789
    %v1806 = vadd.f32 %v1758, %v1790
    %v1807 = vadd.f32 %v1759, %v1791
    %v1808 = vadd.f32 %v1760, %v1792
    %v1809 = vadd.f32 %v1761, %v1793
    %v1810 = vadd.f32 %v1762, %v1794
    %v1811 = vadd.f32 %v1763, %v1795
    %v1812 = vadd.f32 %v1764, %v1796
    %v1813 = vadd.f32 %v1765, %v1797
    %v1814 = vadd.f32 %v1766, %v1798
    %v1815 = vadd.f32 %v1767, %v1799
    %v1816 = vadd.f32 %v1768, %v1800
    %v1817 = vld [vmem:[#allocation5] sm:$0xf]
    %v1818 = vld [vmem:[#allocation5 + $0x4] sm:$0xf]
    %v1819 = vld [vmem:[#allocation5 + $0x8] sm:$0xf]
    %v1820 = vld [vmem:[#allocation5 + $0xc] sm:$0xf]
    %v1821 = vld [vmem:[#allocation5 + $0x10] sm:$0xf]
    %v1822 = vld [vmem:[#allocation5 + $0x14] sm:$0xf]
    %v1823 = vld [vmem:[#allocation5 + $0x18] sm:$0xf]
    %v1824 = vld [vmem:[#allocation5 + $0x1c] sm:$0xf]
    %v1825 = vld [vmem:[#allocation5 + $0x20] sm:$0xf]
    %v1826 = vld [vmem:[#allocation5 + $0x24] sm:$0xf]
    %v1827 = vld [vmem:[#allocation5 + $0x28] sm:$0xf]
    %v1828 = vld [vmem:[#allocation5 + $0x2c] sm:$0xf]
    %v1829 = vld [vmem:[#allocation5 + $0x30] sm:$0xf]
    %v1830 = vld [vmem:[#allocation5 + $0x34] sm:$0xf]
    %v1831 = vld [vmem:[#allocation5 + $0x38] sm:$0xf]
    %v1832 = vld [vmem:[#allocation5 + $0x3c] sm:$0xf]
    %v1833 = vld [vmem:[#allocation5 + $0x40] sm:$0xf]
    %v1834 = vld [vmem:[#allocation5 + $0x44] sm:$0xf]
    %v1835 = vld [vmem:[#allocation5 + $0x48] sm:$0xf]
    %v1836 = vld [vmem:[#allocation5 + $0x4c] sm:$0xf]
    %v1837 = vld [vmem:[#allocation5 + $0x50] sm:$0xf]
    %v1838 = vld [vmem:[#allocation5 + $0x54] sm:$0xf]
    %v1839 = vld [vmem:[#allocation5 + $0x58] sm:$0xf]
    %v1840 = vld [vmem:[#allocation5 + $0x5c] sm:$0xf]
    %v1841 = vld [vmem:[#allocation5 + $0x60] sm:$0xf]
    %v1842 = vld [vmem:[#allocation5 + $0x64] sm:$0xf]
    %v1843 = vld [vmem:[#allocation5 + $0x68] sm:$0xf]
    %v1844 = vld [vmem:[#allocation5 + $0x6c] sm:$0xf]
    %v1845 = vld [vmem:[#allocation5 + $0x70] sm:$0xf]
    %v1846 = vld [vmem:[#allocation5 + $0x74] sm:$0xf]
    %v1847 = vld [vmem:[#allocation5 + $0x78] sm:$0xf]
    %v1848 = vld [vmem:[#allocation5 + $0x7c] sm:$0xf]
    %v1849 = vld [vmem:[#allocation5 + $0x80] sm:$0xf]
    %v1850 = vld [vmem:[#allocation5 + $0x84] sm:$0xf]
    %v1851 = vld [vmem:[#allocation5 + $0x88] sm:$0xf]
    %v1852 = vld [vmem:[#allocation5 + $0x8c] sm:$0xf]
    %v1853 = vld [vmem:[#allocation5 + $0x90] sm:$0xf]
    %v1854 = vld [vmem:[#allocation5 + $0x94] sm:$0xf]
    %v1855 = vld [vmem:[#allocation5 + $0x98] sm:$0xf]
    %v1856 = vld [vmem:[#allocation5 + $0x9c] sm:$0xf]
    %v1857 = vld [vmem:[#allocation5 + $0xa0] sm:$0xf]
    %v1858 = vld [vmem:[#allocation5 + $0xa4] sm:$0xf]
    %v1859 = vld [vmem:[#allocation5 + $0xa8] sm:$0xf]
    %v1860 = vld [vmem:[#allocation5 + $0xac] sm:$0xf]
    %v1861 = vld [vmem:[#allocation5 + $0xb0] sm:$0xf]
    %v1862 = vld [vmem:[#allocation5 + $0xb4] sm:$0xf]
    %v1863 = vld [vmem:[#allocation5 + $0xb8] sm:$0xf]
    %v1864 = vld [vmem:[#allocation5 + $0xbc] sm:$0xf]
    %v1865 = vld [vmem:[#allocation5 + $0xc0] sm:$0xf]
    %v1866 = vld [vmem:[#allocation5 + $0xc4] sm:$0xf]
    %v1867 = vld [vmem:[#allocation5 + $0xc8] sm:$0xf]
    %v1868 = vld [vmem:[#allocation5 + $0xcc] sm:$0xf]
    %v1869 = vld [vmem:[#allocation5 + $0xd0] sm:$0xf]
    %v1870 = vld [vmem:[#allocation5 + $0xd4] sm:$0xf]
    %v1871 = vld [vmem:[#allocation5 + $0xd8] sm:$0xf]
    %v1872 = vld [vmem:[#allocation5 + $0xdc] sm:$0xf]
    %v1873 = vld [vmem:[#allocation5 + $0xe0] sm:$0xf]
    %v1874 = vld [vmem:[#allocation5 + $0xe4] sm:$0xf]
    %v1875 = vld [vmem:[#allocation5 + $0xe8] sm:$0xf]
    %v1876 = vld [vmem:[#allocation5 + $0xec] sm:$0xf]
    %v1877 = vld [vmem:[#allocation5 + $0xf0] sm:$0xf]
    %v1878 = vld [vmem:[#allocation5 + $0xf4] sm:$0xf]
    %v1879 = vld [vmem:[#allocation5 + $0xf8] sm:$0xf]
    %v1880 = vld [vmem:[#allocation5 + $0xfc] sm:$0xf]
    %v1881 = vld [vmem:[#allocation5 + $0x100] sm:$0xf]
    %v1882 = vld [vmem:[#allocation5 + $0x104] sm:$0xf]
    %v1883 = vld [vmem:[#allocation5 + $0x108] sm:$0xf]
    %v1884 = vld [vmem:[#allocation5 + $0x10c] sm:$0xf]
    %v1885 = vld [vmem:[#allocation5 + $0x110] sm:$0xf]
    %v1886 = vld [vmem:[#allocation5 + $0x114] sm:$0xf]
    %v1887 = vld [vmem:[#allocation5 + $0x118] sm:$0xf]
    %v1888 = vld [vmem:[#allocation5 + $0x11c] sm:$0xf]
    %v1889 = vld [vmem:[#allocation5 + $0x120] sm:$0xf]
    %v1890 = vld [vmem:[#allocation5 + $0x124] sm:$0xf]
    %v1891 = vld [vmem:[#allocation5 + $0x128] sm:$0xf]
    %v1892 = vld [vmem:[#allocation5 + $0x12c] sm:$0xf]
    %v1893 = vld [vmem:[#allocation5 + $0x130] sm:$0xf]
    %v1894 = vld [vmem:[#allocation5 + $0x134] sm:$0xf]
    %v1895 = vld [vmem:[#allocation5 + $0x138] sm:$0xf]
    %v1896 = vld [vmem:[#allocation5 + $0x13c] sm:$0xf]
    %v1897 = vld [vmem:[#allocation5 + $0x140] sm:$0xf]
    %v1898 = vld [vmem:[#allocation5 + $0x144] sm:$0xf]
    %v1899 = vld [vmem:[#allocation5 + $0x148] sm:$0xf]
    %v1900 = vld [vmem:[#allocation5 + $0x14c] sm:$0xf]
    %v1901 = vld [vmem:[#allocation5 + $0x150] sm:$0xf]
    %v1902 = vld [vmem:[#allocation5 + $0x154] sm:$0xf]
    %v1903 = vld [vmem:[#allocation5 + $0x158] sm:$0xf]
    %v1904 = vld [vmem:[#allocation5 + $0x15c] sm:$0xf]
    %v1905 = vld [vmem:[#allocation5 + $0x160] sm:$0xf]
    %v1906 = vld [vmem:[#allocation5 + $0x164] sm:$0xf]
    %v1907 = vld [vmem:[#allocation5 + $0x168] sm:$0xf]
    %v1908 = vld [vmem:[#allocation5 + $0x16c] sm:$0xf]
    %v1909 = vld [vmem:[#allocation5 + $0x170] sm:$0xf]
    %v1910 = vld [vmem:[#allocation5 + $0x174] sm:$0xf]
    %v1911 = vld [vmem:[#allocation5 + $0x178] sm:$0xf]
    %v1912 = vld [vmem:[#allocation5 + $0x17c] sm:$0xf]
    %v1913 = vld [vmem:[#allocation5 + $0x180] sm:$0xf]
    %v1914 = vld [vmem:[#allocation5 + $0x184] sm:$0xf]
    %v1915 = vld [vmem:[#allocation5 + $0x188] sm:$0xf]
    %v1916 = vld [vmem:[#allocation5 + $0x18c] sm:$0xf]
    %v1917 = vld [vmem:[#allocation5 + $0x190] sm:$0xf]
    %v1918 = vld [vmem:[#allocation5 + $0x194] sm:$0xf]
    %v1919 = vld [vmem:[#allocation5 + $0x198] sm:$0xf]
    %v1920 = vld [vmem:[#allocation5 + $0x19c] sm:$0xf]
    %v1921 = vld [vmem:[#allocation5 + $0x1a0] sm:$0xf]
    %v1922 = vld [vmem:[#allocation5 + $0x1a4] sm:$0xf]
    %v1923 = vld [vmem:[#allocation5 + $0x1a8] sm:$0xf]
    %v1924 = vld [vmem:[#allocation5 + $0x1ac] sm:$0xf]
    %v1925 = vld [vmem:[#allocation5 + $0x1b0] sm:$0xf]
    %v1926 = vld [vmem:[#allocation5 + $0x1b4] sm:$0xf]
    %v1927 = vld [vmem:[#allocation5 + $0x1b8] sm:$0xf]
    %v1928 = vld [vmem:[#allocation5 + $0x1bc] sm:$0xf]
    %v1929 = vld [vmem:[#allocation5 + $0x1c0] sm:$0xf]
    %v1930 = vld [vmem:[#allocation5 + $0x1c4] sm:$0xf]
    %v1931 = vld [vmem:[#allocation5 + $0x1c8] sm:$0xf]
    %v1932 = vld [vmem:[#allocation5 + $0x1cc] sm:$0xf]
    %v1933 = vld [vmem:[#allocation5 + $0x1d0] sm:$0xf]
    %v1934 = vld [vmem:[#allocation5 + $0x1d4] sm:$0xf]
    %v1935 = vld [vmem:[#allocation5 + $0x1d8] sm:$0xf]
    %v1936 = vld [vmem:[#allocation5 + $0x1dc] sm:$0xf]
    %v1937 = vld [vmem:[#allocation5 + $0x1e0] sm:$0xf]
    %v1938 = vld [vmem:[#allocation5 + $0x1e4] sm:$0xf]
    %v1939 = vld [vmem:[#allocation5 + $0x1e8] sm:$0xf]
    %v1940 = vld [vmem:[#allocation5 + $0x1ec] sm:$0xf]
    %v1941 = vld [vmem:[#allocation5 + $0x1f0] sm:$0xf]
    %v1942 = vld [vmem:[#allocation5 + $0x1f4] sm:$0xf]
    %v1943 = vld [vmem:[#allocation5 + $0x1f8] sm:$0xf]
    %v1944 = vld [vmem:[#allocation5 + $0x1fc] sm:$0xf]
    %v1945 = vpack.c.bf16 %v1809, %v1801
    %v1946 = vpack.c.bf16 %v1810, %v1802
    %v1947 = vpack.c.bf16 %v1811, %v1803
    %v1948 = vpack.c.bf16 %v1812, %v1804
    %v1949 = vpack.c.bf16 %v1813, %v1805
    %v1950 = vpack.c.bf16 %v1814, %v1806
    %v1951 = vpack.c.bf16 %v1815, %v1807
    %v1952 = vpack.c.bf16 %v1816, %v1808
    %v1953 = vunpack.c.l.bf16 %v1945
    %v1954 = vunpack.c.l.bf16 %v1946
    %v1955 = vunpack.c.l.bf16 %v1947
    %v1956 = vunpack.c.l.bf16 %v1948
    %v1957 = vunpack.c.l.bf16 %v1949
    %v1958 = vunpack.c.l.bf16 %v1950
    %v1959 = vunpack.c.l.bf16 %v1951
    %v1960 = vunpack.c.l.bf16 %v1952
    %v1961 = vunpack.c.h.bf16 %v1945
    %v1962 = vunpack.c.h.bf16 %v1946
    %v1963 = vunpack.c.h.bf16 %v1947
    %v1964 = vunpack.c.h.bf16 %v1948
    %v1965 = vunpack.c.h.bf16 %v1949
    %v1966 = vunpack.c.h.bf16 %v1950
    %v1967 = vunpack.c.h.bf16 %v1951
    %v1968 = vunpack.c.h.bf16 %v1952
    %v1969 = vsub.f32 %v1801, %v1953
    %v1970 = vsub.f32 %v1802, %v1954
    %v1971 = vsub.f32 %v1803, %v1955
    %v1972 = vsub.f32 %v1804, %v1956
    %v1973 = vsub.f32 %v1805, %v1957
    %v1974 = vsub.f32 %v1806, %v1958
    %v1975 = vsub.f32 %v1807, %v1959
    %v1976 = vsub.f32 %v1808, %v1960
    %v1977 = vsub.f32 %v1809, %v1961
    %v1978 = vsub.f32 %v1810, %v1962
    %v1979 = vsub.f32 %v1811, %v1963
    %v1980 = vsub.f32 %v1812, %v1964
    %v1981 = vsub.f32 %v1813, %v1965
    %v1982 = vsub.f32 %v1814, %v1966
    %v1983 = vsub.f32 %v1815, %v1967
    %v1984 = vsub.f32 %v1816, %v1968
    %v1985 = vpack.c.bf16 %v1977, %v1969
    %v1986 = vpack.c.bf16 %v1978, %v1970
    %v1987 = vpack.c.bf16 %v1979, %v1971
    %v1988 = vpack.c.bf16 %v1980, %v1972
    %v1989 = vpack.c.bf16 %v1981, %v1973
    %v1990 = vpack.c.bf16 %v1982, %v1974
    %v1991 = vpack.c.bf16 %v1983, %v1975
    %v1992 = vpack.c.bf16 %v1984, %v1976
    %v1993 = vunpack.c.l.bf16 %v1985
    %v1994 = vunpack.c.l.bf16 %v1986
    %v1995 = vunpack.c.l.bf16 %v1987
    %v1996 = vunpack.c.l.bf16 %v1988
    %v1997 = vunpack.c.l.bf16 %v1989
    %v1998 = vunpack.c.l.bf16 %v1990
    %v1999 = vunpack.c.l.bf16 %v1991
    %v2000 = vunpack.c.l.bf16 %v1992
    %v2001 = vunpack.c.h.bf16 %v1985
    %v2002 = vunpack.c.h.bf16 %v1986
    %v2003 = vunpack.c.h.bf16 %v1987
    %v2004 = vunpack.c.h.bf16 %v1988
    %v2005 = vunpack.c.h.bf16 %v1989
    %v2006 = vunpack.c.h.bf16 %v1990
    %v2007 = vunpack.c.h.bf16 %v1991
    %v2008 = vunpack.c.h.bf16 %v1992
    %v2009 = vsub.f32 %v1969, %v1993
    %v2010 = vsub.f32 %v1970, %v1994
    %v2011 = vsub.f32 %v1971, %v1995
    %v2012 = vsub.f32 %v1972, %v1996
    %v2013 = vsub.f32 %v1973, %v1997
    %v2014 = vsub.f32 %v1974, %v1998
    %v2015 = vsub.f32 %v1975, %v1999
    %v2016 = vsub.f32 %v1976, %v2000
    %v2017 = vsub.f32 %v1977, %v2001
    %v2018 = vsub.f32 %v1978, %v2002
    %v2019 = vsub.f32 %v1979, %v2003
    %v2020 = vsub.f32 %v1980, %v2004
    %v2021 = vsub.f32 %v1981, %v2005
    %v2022 = vsub.f32 %v1982, %v2006
    %v2023 = vsub.f32 %v1983, %v2007
    %v2024 = vsub.f32 %v1984, %v2008
    %v2025 = vpack.c.bf16 %v2017, %v2009
    %v2026 = vpack.c.bf16 %v2018, %v2010
    %v2027 = vpack.c.bf16 %v2019, %v2011
    %v2028 = vpack.c.bf16 %v2020, %v2012
    %v2029 = vpack.c.bf16 %v2021, %v2013
    %v2030 = vpack.c.bf16 %v2022, %v2014
    %v2031 = vpack.c.bf16 %v2023, %v2015
    %v2032 = vpack.c.bf16 %v2024, %v2016
    %v2161 = vunpack.c.l.b16 %v1817
    %v2162 = vunpack.c.l.b16 %v1818
    %v2163 = vunpack.c.l.b16 %v1819
    %v2164 = vunpack.c.l.b16 %v1820
    %v2165 = vunpack.c.l.b16 %v1821
    %v2166 = vunpack.c.l.b16 %v1822
    %v2167 = vunpack.c.l.b16 %v1823
    %v2168 = vunpack.c.l.b16 %v1824
    %v2169 = vunpack.c.l.b16 %v1825
    %v2170 = vunpack.c.l.b16 %v1826
    %v2171 = vunpack.c.l.b16 %v1827
    %v2172 = vunpack.c.l.b16 %v1828
    %v2173 = vunpack.c.l.b16 %v1829
    %v2174 = vunpack.c.l.b16 %v1830
    %v2175 = vunpack.c.l.b16 %v1831
    %v2176 = vunpack.c.l.b16 %v1832
    %v2177 = vunpack.c.l.b16 %v1833
    %v2178 = vunpack.c.l.b16 %v1834
    %v2179 = vunpack.c.l.b16 %v1835
    %v2180 = vunpack.c.l.b16 %v1836
    %v2181 = vunpack.c.l.b16 %v1837
    %v2182 = vunpack.c.l.b16 %v1838
    %v2183 = vunpack.c.l.b16 %v1839
    %v2184 = vunpack.c.l.b16 %v1840
    %v2185 = vunpack.c.l.b16 %v1841
    %v2186 = vunpack.c.l.b16 %v1842
    %v2187 = vunpack.c.l.b16 %v1843
    %v2188 = vunpack.c.l.b16 %v1844
    %v2189 = vunpack.c.l.b16 %v1845
    %v2190 = vunpack.c.l.b16 %v1846
    %v2191 = vunpack.c.l.b16 %v1847
    %v2192 = vunpack.c.l.b16 %v1848
    %v2193 = vunpack.c.l.b16 %v1849
    %v2194 = vunpack.c.l.b16 %v1850
    %v2195 = vunpack.c.l.b16 %v1851
    %v2196 = vunpack.c.l.b16 %v1852
    %v2197 = vunpack.c.l.b16 %v1853
    %v2198 = vunpack.c.l.b16 %v1854
    %v2199 = vunpack.c.l.b16 %v1855
    %v2200 = vunpack.c.l.b16 %v1856
    %v2201 = vunpack.c.l.b16 %v1857
    %v2202 = vunpack.c.l.b16 %v1858
    %v2203 = vunpack.c.l.b16 %v1859
    %v2204 = vunpack.c.l.b16 %v1860
    %v2205 = vunpack.c.l.b16 %v1861
    %v2206 = vunpack.c.l.b16 %v1862
    %v2207 = vunpack.c.l.b16 %v1863
    %v2208 = vunpack.c.l.b16 %v1864
    %v2209 = vunpack.c.l.b16 %v1865
    %v2210 = vunpack.c.l.b16 %v1866
    %v2211 = vunpack.c.l.b16 %v1867
    %v2212 = vunpack.c.l.b16 %v1868
    %v2213 = vunpack.c.l.b16 %v1869
    %v2214 = vunpack.c.l.b16 %v1870
    %v2215 = vunpack.c.l.b16 %v1871
    %v2216 = vunpack.c.l.b16 %v1872
    %v2217 = vunpack.c.l.b16 %v1873
    %v2218 = vunpack.c.l.b16 %v1874
    %v2219 = vunpack.c.l.b16 %v1875
    %v2220 = vunpack.c.l.b16 %v1876
    %v2221 = vunpack.c.l.b16 %v1877
    %v2222 = vunpack.c.l.b16 %v1878
    %v2223 = vunpack.c.l.b16 %v1879
    %v2224 = vunpack.c.l.b16 %v1880
    %v2225 = vunpack.c.l.b16 %v1881
    %v2226 = vunpack.c.l.b16 %v1882
    %v2227 = vunpack.c.l.b16 %v1883
    %v2228 = vunpack.c.l.b16 %v1884
    %v2229 = vunpack.c.l.b16 %v1885
    %v2230 = vunpack.c.l.b16 %v1886
    %v2231 = vunpack.c.l.b16 %v1887
    %v2232 = vunpack.c.l.b16 %v1888
    %v2233 = vunpack.c.l.b16 %v1889
    %v2234 = vunpack.c.l.b16 %v1890
    %v2235 = vunpack.c.l.b16 %v1891
    %v2236 = vunpack.c.l.b16 %v1892
    %v2237 = vunpack.c.l.b16 %v1893
    %v2238 = vunpack.c.l.b16 %v1894
    %v2239 = vunpack.c.l.b16 %v1895
    %v2240 = vunpack.c.l.b16 %v1896
    %v2241 = vunpack.c.l.b16 %v1897
    %v2242 = vunpack.c.l.b16 %v1898
    %v2243 = vunpack.c.l.b16 %v1899
    %v2244 = vunpack.c.l.b16 %v1900
    %v2245 = vunpack.c.l.b16 %v1901
    %v2246 = vunpack.c.l.b16 %v1902
    %v2247 = vunpack.c.l.b16 %v1903
    %v2248 = vunpack.c.l.b16 %v1904
    %v2249 = vunpack.c.l.b16 %v1905
    %v2250 = vunpack.c.l.b16 %v1906
    %v2251 = vunpack.c.l.b16 %v1907
    %v2252 = vunpack.c.l.b16 %v1908
    %v2253 = vunpack.c.l.b16 %v1909
    %v2254 = vunpack.c.l.b16 %v1910
    %v2255 = vunpack.c.l.b16 %v1911
    %v2256 = vunpack.c.l.b16 %v1912
    %v2257 = vunpack.c.l.b16 %v1913
    %v2258 = vunpack.c.l.b16 %v1914
    %v2259 = vunpack.c.l.b16 %v1915
    %v2260 = vunpack.c.l.b16 %v1916
    %v2261 = vunpack.c.l.b16 %v1917
    %v2262 = vunpack.c.l.b16 %v1918
    %v2263 = vunpack.c.l.b16 %v1919
    %v2264 = vunpack.c.l.b16 %v1920
    %v2265 = vunpack.c.l.b16 %v1921
    %v2266 = vunpack.c.l.b16 %v1922
    %v2267 = vunpack.c.l.b16 %v1923
    %v2268 = vunpack.c.l.b16 %v1924
    %v2269 = vunpack.c.l.b16 %v1925
    %v2270 = vunpack.c.l.b16 %v1926
    %v2271 = vunpack.c.l.b16 %v1927
    %v2272 = vunpack.c.l.b16 %v1928
    %v2273 = vunpack.c.l.b16 %v1929
    %v2274 = vunpack.c.l.b16 %v1930
    %v2275 = vunpack.c.l.b16 %v1931
    %v2276 = vunpack.c.l.b16 %v1932
    %v2277 = vunpack.c.l.b16 %v1933
    %v2278 = vunpack.c.l.b16 %v1934
    %v2279 = vunpack.c.l.b16 %v1935
    %v2280 = vunpack.c.l.b16 %v1936
    %v2281 = vunpack.c.l.b16 %v1937
    %v2282 = vunpack.c.l.b16 %v1938
    %v2283 = vunpack.c.l.b16 %v1939
    %v2284 = vunpack.c.l.b16 %v1940
    %v2285 = vunpack.c.l.b16 %v1941
    %v2286 = vunpack.c.l.b16 %v1942
    %v2287 = vunpack.c.l.b16 %v1943
    %v2288 = vunpack.c.l.b16 %v1944
    %v2289 = vpack.c.b16 %v2162, %v2161
    %v2290 = vpack.c.b16 %v2164, %v2163
    %v2291 = vpack.c.b16 %v2166, %v2165
    %v2292 = vpack.c.b16 %v2168, %v2167
    %v2293 = vpack.c.b16 %v2170, %v2169
    %v2294 = vpack.c.b16 %v2172, %v2171
    %v2295 = vpack.c.b16 %v2174, %v2173
    %v2296 = vpack.c.b16 %v2176, %v2175
    %v2297 = vpack.c.b16 %v2178, %v2177
    %v2298 = vpack.c.b16 %v2180, %v2179
    %v2299 = vpack.c.b16 %v2182, %v2181
    %v2300 = vpack.c.b16 %v2184, %v2183
    %v2301 = vpack.c.b16 %v2186, %v2185
    %v2302 = vpack.c.b16 %v2188, %v2187
    %v2303 = vpack.c.b16 %v2190, %v2189
    %v2304 = vpack.c.b16 %v2192, %v2191
    %v2305 = vpack.c.b16 %v2194, %v2193
    %v2306 = vpack.c.b16 %v2196, %v2195
    %v2307 = vpack.c.b16 %v2198, %v2197
    %v2308 = vpack.c.b16 %v2200, %v2199
    %v2309 = vpack.c.b16 %v2202, %v2201
    %v2310 = vpack.c.b16 %v2204, %v2203
    %v2311 = vpack.c.b16 %v2206, %v2205
    %v2312 = vpack.c.b16 %v2208, %v2207
    %v2313 = vpack.c.b16 %v2210, %v2209
    %v2314 = vpack.c.b16 %v2212, %v2211
    %v2315 = vpack.c.b16 %v2214, %v2213
    %v2316 = vpack.c.b16 %v2216, %v2215
    %v2317 = vpack.c.b16 %v2218, %v2217
    %v2318 = vpack.c.b16 %v2220, %v2219
    %v2319 = vpack.c.b16 %v2222, %v2221
    %v2320 = vpack.c.b16 %v2224, %v2223
    %v2321 = vpack.c.b16 %v2226, %v2225
    %v2322 = vpack.c.b16 %v2228, %v2227
    %v2323 = vpack.c.b16 %v2230, %v2229
    %v2324 = vpack.c.b16 %v2232, %v2231
    %v2325 = vpack.c.b16 %v2234, %v2233
    %v2326 = vpack.c.b16 %v2236, %v2235
    %v2327 = vpack.c.b16 %v2238, %v2237
    %v2328 = vpack.c.b16 %v2240, %v2239
    %v2329 = vpack.c.b16 %v2242, %v2241
    %v2330 = vpack.c.b16 %v2244, %v2243
    %v2331 = vpack.c.b16 %v2246, %v2245
    %v2332 = vpack.c.b16 %v2248, %v2247
    %v2333 = vpack.c.b16 %v2250, %v2249
    %v2334 = vpack.c.b16 %v2252, %v2251
    %v2335 = vpack.c.b16 %v2254, %v2253
    %v2336 = vpack.c.b16 %v2256, %v2255
    %v2337 = vpack.c.b16 %v2258, %v2257
    %v2338 = vpack.c.b16 %v2260, %v2259
    %v2339 = vpack.c.b16 %v2262, %v2261
    %v2340 = vpack.c.b16 %v2264, %v2263
    %v2341 = vpack.c.b16 %v2266, %v2265
    %v2342 = vpack.c.b16 %v2268, %v2267
    %v2343 = vpack.c.b16 %v2270, %v2269
    %v2344 = vpack.c.b16 %v2272, %v2271
    %v2345 = vpack.c.b16 %v2274, %v2273
    %v2346 = vpack.c.b16 %v2276, %v2275
    %v2347 = vpack.c.b16 %v2278, %v2277
    %v2348 = vpack.c.b16 %v2280, %v2279
    %v2349 = vpack.c.b16 %v2282, %v2281
    %v2350 = vpack.c.b16 %v2284, %v2283
    %v2351 = vpack.c.b16 %v2286, %v2285
    %v2352 = vpack.c.b16 %v2288, %v2287
    %2417 = vmatprep.subr.bf16.mxu0 0
    %2418 = vmatpush1.bf16.msra.mxu0 %v2289
    %2419 = vmatprep.subr.bf16.mxu0 0
    %2420 = vmatpush1.bf16.msra.mxu0 %v2290
    %2421 = vmatprep.subr.bf16.mxu0 0
    %2422 = vmatpush1.bf16.msra.mxu0 %v2291
    %2423 = vmatprep.subr.bf16.mxu0 0
    %2424 = vmatpush1.bf16.msra.mxu0 %v2292
    %2425 = vmatprep.subr.bf16.mxu0 0
    %2426 = vmatpush1.bf16.msra.mxu0 %v2293
    %2427 = vmatprep.subr.bf16.mxu0 0
    %2428 = vmatpush1.bf16.msra.mxu0 %v2294
    %2429 = vmatprep.subr.bf16.mxu0 0
    %2430 = vmatpush1.bf16.msra.mxu0 %v2295
    %2431 = vmatprep.subr.bf16.mxu0 0
    %2432 = vmatpush1.bf16.msra.mxu0 %v2296
    %2433 = vmatprep.subr.bf16.mxu0 0
    %2434 = vmatpush1.bf16.msra.mxu0 %v2297
    %2435 = vmatprep.subr.bf16.mxu0 0
    %2436 = vmatpush1.bf16.msra.mxu0 %v2298
    %2437 = vmatprep.subr.bf16.mxu0 0
    %2438 = vmatpush1.bf16.msra.mxu0 %v2299
    %2439 = vmatprep.subr.bf16.mxu0 0
    %2440 = vmatpush1.bf16.msra.mxu0 %v2300
    %2441 = vmatprep.subr.bf16.mxu0 0
    %2442 = vmatpush1.bf16.msra.mxu0 %v2301
    %2443 = vmatprep.subr.bf16.mxu0 0
    %2444 = vmatpush1.bf16.msra.mxu0 %v2302
    %2445 = vmatprep.subr.bf16.mxu0 0
    %2446 = vmatpush1.bf16.msra.mxu0 %v2303
    %2447 = vmatprep.subr.bf16.mxu0 0
    %2448 = vmatpush1.bf16.msra.mxu0 %v2304
    %2449 = vmatprep.mubr.bf16.mxu0 %v1986
    %2450 = vmatmul.mubr.bf16.gmra.mrb[0].mxu0 %v1985
    %v2451 = vpop.f32.mrb[0].mxu0
    %v2452 = vadd.f32 0.0, %v2451
    %v2453 = vpop.f32.mrb[0].mxu0
    %v2454 = vpop.f32.mrb[0].mxu0
    %v2455 = vadd.f32 0.0, %v2454
    %v2456 = vpop.f32.mrb[0].mxu0
    %2457 = vdwg.mxu0
    %2458 = vmatprep.subr.bf16.mxu0 0
    %2459 = vmatpush1.bf16.msra.mxu0 %v2305
    %2460 = vmatprep.subr.bf16.mxu0 0
    %2461 = vmatpush1.bf16.msra.mxu0 %v2306
    %2462 = vmatprep.subr.bf16.mxu0 0
    %2463 = vmatpush1.bf16.msra.mxu0 %v2307
    %2464 = vmatprep.subr.bf16.mxu0 0
    %2465 = vmatpush1.bf16.msra.mxu0 %v2308
    %2466 = vmatprep.subr.bf16.mxu0 0
    %2467 = vmatpush1.bf16.msra.mxu0 %v2309
    %2468 = vmatprep.subr.bf16.mxu0 0
    %2469 = vmatpush1.bf16.msra.mxu0 %v2310
    %2470 = vmatprep.subr.bf16.mxu0 0
    %2471 = vmatpush1.bf16.msra.mxu0 %v2311
    %2472 = vmatprep.subr.bf16.mxu0 0
    %2473 = vmatpush1.bf16.msra.mxu0 %v2312
    %2474 = vmatprep.subr.bf16.mxu0 0
    %2475 = vmatpush1.bf16.msra.mxu0 %v2313
    %2476 = vmatprep.subr.bf16.mxu0 0
    %2477 = vmatpush1.bf16.msra.mxu0 %v2314
    %2478 = vmatprep.subr.bf16.mxu0 0
    %2479 = vmatpush1.bf16.msra.mxu0 %v2315
    %2480 = vmatprep.subr.bf16.mxu0 0
    %2481 = vmatpush1.bf16.msra.mxu0 %v2316
    %2482 = vmatprep.subr.bf16.mxu0 0
    %2483 = vmatpush1.bf16.msra.mxu0 %v2317
    %2484 = vmatprep.subr.bf16.mxu0 0
    %2485 = vmatpush1.bf16.msra.mxu0 %v2318
    %2486 = vmatprep.subr.bf16.mxu0 0
    %2487 = vmatpush1.bf16.msra.mxu0 %v2319
    %2488 = vmatprep.subr.bf16.mxu0 0
    %2489 = vmatpush1.bf16.msra.mxu0 %v2320
    %2490 = vmatprep.mubr.bf16.mxu0 %v1988
    %2491 = vmatmul.mubr.bf16.gmra.mrb[0].mxu0 %v1987
    %v2492 = vpop.f32.mrb[0].mxu0
    %v2493 = vadd.f32 %v2452, %v2492
    %v2494 = vpop.f32.mrb[0].mxu0
    %v2495 = vpop.f32.mrb[0].mxu0
    %v2496 = vadd.f32 %v2455, %v2495
    %v2497 = vpop.f32.mrb[0].mxu0
    %2498 = vdwg.mxu0
    %2499 = vmatprep.subr.bf16.mxu0 0
    %2500 = vmatpush1.bf16.msra.mxu0 %v2321
    %2501 = vmatprep.subr.bf16.mxu0 0
    %2502 = vmatpush1.bf16.msra.mxu0 %v2322
    %2503 = vmatprep.subr.bf16.mxu0 0
    %2504 = vmatpush1.bf16.msra.mxu0 %v2323
    %2505 = vmatprep.subr.bf16.mxu0 0
    %2506 = vmatpush1.bf16.msra.mxu0 %v2324
    %2507 = vmatprep.subr.bf16.mxu0 0
    %2508 = vmatpush1.bf16.msra.mxu0 %v2325
    %2509 = vmatprep.subr.bf16.mxu0 0
    %2510 = vmatpush1.bf16.msra.mxu0 %v2326
    %2511 = vmatprep.subr.bf16.mxu0 0
    %2512 = vmatpush1.bf16.msra.mxu0 %v2327
    %2513 = vmatprep.subr.bf16.mxu0 0
    %2514 = vmatpush1.bf16.msra.mxu0 %v2328
    %2515 = vmatprep.subr.bf16.mxu0 0
    %2516 = vmatpush1.bf16.msra.mxu0 %v2329
    %2517 = vmatprep.subr.bf16.mxu0 0
    %2518 = vmatpush1.bf16.msra.mxu0 %v2330
    %2519 = vmatprep.subr.bf16.mxu0 0
    %2520 = vmatpush1.bf16.msra.mxu0 %v2331
    %2521 = vmatprep.subr.bf16.mxu0 0
    %2522 = vmatpush1.bf16.msra.mxu0 %v2332
    %2523 = vmatprep.subr.bf16.mxu0 0
    %2524 = vmatpush1.bf16.msra.mxu0 %v2333
    %2525 = vmatprep.subr.bf16.mxu0 0
    %2526 = vmatpush1.bf16.msra.mxu0 %v2334
    %2527 = vmatprep.subr.bf16.mxu0 0
    %2528 = vmatpush1.bf16.msra.mxu0 %v2335
    %2529 = vmatprep.subr.bf16.mxu0 0
    %2530 = vmatpush1.bf16.msra.mxu0 %v2336
    %2531 = vmatprep.mubr.bf16.mxu0 %v1990
    %2532 = vmatmul.mubr.bf16.gmra.mrb[0].mxu0 %v1989
    %v2533 = vpop.f32.mrb[0].mxu0
    %v2534 = vadd.f32 %v2493, %v2533
    %v2535 = vpop.f32.mrb[0].mxu0
    %v2536 = vpop.f32.mrb[0].mxu0
    %v2537 = vadd.f32 %v2496, %v2536
    %v2538 = vpop.f32.mrb[0].mxu0
    %2539 = vdwg.mxu0
    %2540 = vmatprep.subr.bf16.mxu0 0
    %2541 = vmatpush1.bf16.msra.mxu0 %v2337
    %2542 = vmatprep.subr.bf16.mxu0 0
    %2543 = vmatpush1.bf16.msra.mxu0 %v2338
    %2544 = vmatprep.subr.bf16.mxu0 0
    %2545 = vmatpush1.bf16.msra.mxu0 %v2339
    %2546 = vmatprep.subr.bf16.mxu0 0
    %2547 = vmatpush1.bf16.msra.mxu0 %v2340
    %2548 = vmatprep.subr.bf16.mxu0 0
    %2549 = vmatpush1.bf16.msra.mxu0 %v2341
    %2550 = vmatprep.subr.bf16.mxu0 0
    %2551 = vmatpush1.bf16.msra.mxu0 %v2342
    %2552 = vmatprep.subr.bf16.mxu0 0
    %2553 = vmatpush1.bf16.msra.mxu0 %v2343
    %2554 = vmatprep.subr.bf16.mxu0 0
    %2555 = vmatpush1.bf16.msra.mxu0 %v2344
    %2556 = vmatprep.subr.bf16.mxu0 0
    %2557 = vmatpush1.bf16.msra.mxu0 %v2345
    %2558 = vmatprep.subr.bf16.mxu0 0
    %2559 = vmatpush1.bf16.msra.mxu0 %v2346
    %2560 = vmatprep.subr.bf16.mxu0 0
    %2561 = vmatpush1.bf16.msra.mxu0 %v2347
    %2562 = vmatprep.subr.bf16.mxu0 0
    %2563 = vmatpush1.bf16.msra.mxu0 %v2348
    %2564 = vmatprep.subr.bf16.mxu0 0
    %2565 = vmatpush1.bf16.msra.mxu0 %v2349
    %2566 = vmatprep.subr.bf16.mxu0 0
    %2567 = vmatpush1.bf16.msra.mxu0 %v2350
    %2568 = vmatprep.subr.bf16.mxu0 0
    %2569 = vmatpush1.bf16.msra.mxu0 %v2351
    %2570 = vmatprep.subr.bf16.mxu0 0
    %2571 = vmatpush1.bf16.msra.mxu0 %v2352
    %2572 = vmatprep.mubr.bf16.mxu0 %v1992
    %2573 = vmatmul.mubr.bf16.gmra.mrb[0].mxu0 %v1991
    %v2574 = vpop.f32.mrb[0].mxu0
    %v2575 = vadd.f32 %v2534, %v2574
    %v2576 = vpop.f32.mrb[0].mxu0
    %v2577 = vpop.f32.mrb[0].mxu0
    %v2578 = vadd.f32 %v2537, %v2577
    %v2579 = vpop.f32.mrb[0].mxu0
    %2580 = vdwg.mxu0
    %2581 = vmatprep.subr.bf16.mxu0 0
    %2582 = vmatpush1.bf16.msra.mxu0 %v2289
    %2583 = vmatprep.subr.bf16.mxu0 0
    %2584 = vmatpush1.bf16.msra.mxu0 %v2290
    %2585 = vmatprep.subr.bf16.mxu0 0
    %2586 = vmatpush1.bf16.msra.mxu0 %v2291
    %2587 = vmatprep.subr.bf16.mxu0 0
    %2588 = vmatpush1.bf16.msra.mxu0 %v2292
    %2589 = vmatprep.subr.bf16.mxu0 0
    %2590 = vmatpush1.bf16.msra.mxu0 %v2293
    %2591 = vmatprep.subr.bf16.mxu0 0
    %2592 = vmatpush1.bf16.msra.mxu0 %v2294
    %2593 = vmatprep.subr.bf16.mxu0 0
    %2594 = vmatpush1.bf16.msra.mxu0 %v2295
    %2595 = vmatprep.subr.bf16.mxu0 0
    %2596 = vmatpush1.bf16.msra.mxu0 %v2296
    %2597 = vmatprep.subr.bf16.mxu0 0
    %2598 = vmatpush1.bf16.msra.mxu0 %v2297
    %2599 = vmatprep.subr.bf16.mxu0 0
    %2600 = vmatpush1.bf16.msra.mxu0 %v2298
    %2601 = vmatprep.subr.bf16.mxu0 0
    %2602 = vmatpush1.bf16.msra.mxu0 %v2299
    %2603 = vmatprep.subr.bf16.mxu0 0
    %2604 = vmatpush1.bf16.msra.mxu0 %v2300
    %2605 = vmatprep.subr.bf16.mxu0 0
    %2606 = vmatpush1.bf16.msra.mxu0 %v2301
    %2607 = vmatprep.subr.bf16.mxu0 0
    %2608 = vmatpush1.bf16.msra.mxu0 %v2302
    %2609 = vmatprep.subr.bf16.mxu0 0
    %2610 = vmatpush1.bf16.msra.mxu0 %v2303
    %2611 = vmatprep.subr.bf16.mxu0 0
    %2612 = vmatpush1.bf16.msra.mxu0 %v2304
    %2613 = vmatprep.mubr.bf16.mxu0 %v1946
    %2614 = vmatmul.mubr.bf16.gmra.mrb[0].mxu0 %v1945
    %v2615 = vpop.f32.mrb[0].mxu0
    %v2616 = vadd.f32 %v2575, %v2615
    %v2617 = vpop.f32.mrb[0].mxu0
    %v2618 = vpop.f32.mrb[0].mxu0
    %v2619 = vadd.f32 %v2578, %v2618
    %v2620 = vpop.f32.mrb[0].mxu0
    %2621 = vdwg.mxu0
    %2622 = vmatprep.subr.bf16.mxu0 0
    %2623 = vmatpush1.bf16.msra.mxu0 %v2305
    %2624 = vmatprep.subr.bf16.mxu0 0
    %2625 = vmatpush1.bf16.msra.mxu0 %v2306
    %2626 = vmatprep.subr.bf16.mxu0 0
    %2627 = vmatpush1.bf16.msra.mxu0 %v2307
    %2628 = vmatprep.subr.bf16.mxu0 0
    %2629 = vmatpush1.bf16.msra.mxu0 %v2308
    %2630 = vmatprep.subr.bf16.mxu0 0
    %2631 = vmatpush1.bf16.msra.mxu0 %v2309
    %2632 = vmatprep.subr.bf16.mxu0 0
    %2633 = vmatpush1.bf16.msra.mxu0 %v2310
    %2634 = vmatprep.subr.bf16.mxu0 0
    %2635 = vmatpush1.bf16.msra.mxu0 %v2311
    %2636 = vmatprep.subr.bf16.mxu0 0
    %2637 = vmatpush1.bf16.msra.mxu0 %v2312
    %2638 = vmatprep.subr.bf16.mxu0 0
    %2639 = vmatpush1.bf16.msra.mxu0 %v2313
    %2640 = vmatprep.subr.bf16.mxu0 0
    %2641 = vmatpush1.bf16.msra.mxu0 %v2314
    %2642 = vmatprep.subr.bf16.mxu0 0
    %2643 = vmatpush1.bf16.msra.mxu0 %v2315
    %2644 = vmatprep.subr.bf16.mxu0 0
    %2645 = vmatpush1.bf16.msra.mxu0 %v2316
    %2646 = vmatprep.subr.bf16.mxu0 0
    %2647 = vmatpush1.bf16.msra.mxu0 %v2317
    %2648 = vmatprep.subr.bf16.mxu0 0
    %2649 = vmatpush1.bf16.msra.mxu0 %v2318
    %2650 = vmatprep.subr.bf16.mxu0 0
    %2651 = vmatpush1.bf16.msra.mxu0 %v2319
    %2652 = vmatprep.subr.bf16.mxu0 0
    %2653 = vmatpush1.bf16.msra.mxu0 %v2320
    %2654 = vmatprep.mubr.bf16.mxu0 %v1948
    %2655 = vmatmul.mubr.bf16.gmra.mrb[0].mxu0 %v1947
    %v2656 = vpop.f32.mrb[0].mxu0
    %v2657 = vadd.f32 %v2616, %v2656
    %v2658 = vpop.f32.mrb[0].mxu0
    %v2659 = vpop.f32.mrb[0].mxu0
    %v2660 = vadd.f32 %v2619, %v2659
    %v2661 = vpop.f32.mrb[0].mxu0
    %2662 = vdwg.mxu0
    %2663 = vmatprep.subr.bf16.mxu0 0
    %2664 = vmatpush1.bf16.msra.mxu0 %v2321
    %2665 = vmatprep.subr.bf16.mxu0 0
    %2666 = vmatpush1.bf16.msra.mxu0 %v2322
    %2667 = vmatprep.subr.bf16.mxu0 0
    %2668 = vmatpush1.bf16.msra.mxu0 %v2323
    %2669 = vmatprep.subr.bf16.mxu0 0
    %2670 = vmatpush1.bf16.msra.mxu0 %v2324
    %2671 = vmatprep.subr.bf16.mxu0 0
    %2672 = vmatpush1.bf16.msra.mxu0 %v2325
    %2673 = vmatprep.subr.bf16.mxu0 0
    %2674 = vmatpush1.bf16.msra.mxu0 %v2326
    %2675 = vmatprep.subr.bf16.mxu0 0
    %2676 = vmatpush1.bf16.msra.mxu0 %v2327
    %2677 = vmatprep.subr.bf16.mxu0 0
    %2678 = vmatpush1.bf16.msra.mxu0 %v2328
    %2679 = vmatprep.subr.bf16.mxu0 0
    %2680 = vmatpush1.bf16.msra.mxu0 %v2329
    %2681 = vmatprep.subr.bf16.mxu0 0
    %2682 = vmatpush1.bf16.msra.mxu0 %v2330
    %2683 = vmatprep.subr.bf16.mxu0 0
    %2684 = vmatpush1.bf16.msra.mxu0 %v2331
    %2685 = vmatprep.subr.bf16.mxu0 0
    %2686 = vmatpush1.bf16.msra.mxu0 %v2332
    %2687 = vmatprep.subr.bf16.mxu0 0
    %2688 = vmatpush1.bf16.msra.mxu0 %v2333
    %2689 = vmatprep.subr.bf16.mxu0 0
    %2690 = vmatpush1.bf16.msra.mxu0 %v2334
    %2691 = vmatprep.subr.bf16.mxu0 0
    %2692 = vmatpush1.bf16.msra.mxu0 %v2335
    %2693 = vmatprep.subr.bf16.mxu0 0
    %2694 = vmatpush1.bf16.msra.mxu0 %v2336
    %2695 = vmatprep.mubr.bf16.mxu0 %v1950
    %2696 = vmatmul.mubr.bf16.gmra.mrb[0].mxu0 %v1949
    %v2697 = vpop.f32.mrb[0].mxu0
    %v2698 = vadd.f32 %v2657, %v2697
    %v2699 = vpop.f32.mrb[0].mxu0
    %v2700 = vpop.f32.mrb[0].mxu0
    %v2701 = vadd.f32 %v2660, %v2700
    %v2702 = vpop.f32.mrb[0].mxu0
    %2703 = vdwg.mxu0
    %2704 = vmatprep.subr.bf16.mxu0 0
    %2705 = vmatpush1.bf16.msra.mxu0 %v2337
    %2706 = vmatprep.subr.bf16.mxu0 0
    %2707 = vmatpush1.bf16.msra.mxu0 %v2338
    %2708 = vmatprep.subr.bf16.mxu0 0
    %2709 = vmatpush1.bf16.msra.mxu0 %v2339
    %2710 = vmatprep.subr.bf16.mxu0 0
    %2711 = vmatpush1.bf16.msra.mxu0 %v2340
    %2712 = vmatprep.subr.bf16.mxu0 0
    %2713 = vmatpush1.bf16.msra.mxu0 %v2341
    %2714 = vmatprep.subr.bf16.mxu0 0
    %2715 = vmatpush1.bf16.msra.mxu0 %v2342
    %2716 = vmatprep.subr.bf16.mxu0 0
    %2717 = vmatpush1.bf16.msra.mxu0 %v2343
    %2718 = vmatprep.subr.bf16.mxu0 0
    %2719 = vmatpush1.bf16.msra.mxu0 %v2344
    %2720 = vmatprep.subr.bf16.mxu0 0
    %2721 = vmatpush1.bf16.msra.mxu0 %v2345
    %2722 = vmatprep.subr.bf16.mxu0 0
    %2723 = vmatpush1.bf16.msra.mxu0 %v2346
    %2724 = vmatprep.subr.bf16.mxu0 0
    %2725 = vmatpush1.bf16.msra.mxu0 %v2347
    %2726 = vmatprep.subr.bf16.mxu0 0
    %2727 = vmatpush1.bf16.msra.mxu0 %v2348
    %2728 = vmatprep.subr.bf16.mxu0 0
    %2729 = vmatpush1.bf16.msra.mxu0 %v2349
    %2730 = vmatprep.subr.bf16.mxu0 0
    %2731 = vmatpush1.bf16.msra.mxu0 %v2350
    %2732 = vmatprep.subr.bf16.mxu0 0
    %2733 = vmatpush1.bf16.msra.mxu0 %v2351
    %2734 = vmatprep.subr.bf16.mxu0 0
    %2735 = vmatpush1.bf16.msra.mxu0 %v2352
    %2736 = vmatprep.mubr.bf16.mxu0 %v1952
    %2737 = vmatmul.mubr.bf16.gmra.mrb[0].mxu0 %v1951
    %v2738 = vpop.f32.mrb[0].mxu0
    %v2739 = vadd.f32 %v2698, %v2738
    %v2740 = vpop.f32.mrb[0].mxu0
    %v2741 = vpop.f32.mrb[0].mxu0
    %v2742 = vadd.f32 %v2701, %v2741
    %v2743 = vpop.f32.mrb[0].mxu0
    %2744 = vdwg.mxu0
    %2745 = vmatprep.subr.bf16.mxu0 0
    %2746 = vmatpush1.bf16.msra.mxu0 %v2289
    %2747 = vmatprep.subr.bf16.mxu0 0
    %2748 = vmatpush1.bf16.msra.mxu0 %v2290
    %2749 = vmatprep.subr.bf16.mxu0 0
    %2750 = vmatpush1.bf16.msra.mxu0 %v2291
    %2751 = vmatprep.subr.bf16.mxu0 0
    %2752 = vmatpush1.bf16.msra.mxu0 %v2292
    %2753 = vmatprep.subr.bf16.mxu0 0
    %2754 = vmatpush1.bf16.msra.mxu0 %v2293
    %2755 = vmatprep.subr.bf16.mxu0 0
    %2756 = vmatpush1.bf16.msra.mxu0 %v2294
    %2757 = vmatprep.subr.bf16.mxu0 0
    %2758 = vmatpush1.bf16.msra.mxu0 %v2295
    %2759 = vmatprep.subr.bf16.mxu0 0
    %2760 = vmatpush1.bf16.msra.mxu0 %v2296
    %2761 = vmatprep.subr.bf16.mxu0 0
    %2762 = vmatpush1.bf16.msra.mxu0 %v2297
    %2763 = vmatprep.subr.bf16.mxu0 0
    %2764 = vmatpush1.bf16.msra.mxu0 %v2298
    %2765 = vmatprep.subr.bf16.mxu0 0
    %2766 = vmatpush1.bf16.msra.mxu0 %v2299
    %2767 = vmatprep.subr.bf16.mxu0 0
    %2768 = vmatpush1.bf16.msra.mxu0 %v2300
    %2769 = vmatprep.subr.bf16.mxu0 0
    %2770 = vmatpush1.bf16.msra.mxu0 %v2301
    %2771 = vmatprep.subr.bf16.mxu0 0
    %2772 = vmatpush1.bf16.msra.mxu0 %v2302
    %2773 = vmatprep.subr.bf16.mxu0 0
    %2774 = vmatpush1.bf16.msra.mxu0 %v2303
    %2775 = vmatprep.subr.bf16.mxu0 0
    %2776 = vmatpush1.bf16.msra.mxu0 %v2304
    %2777 = vmatprep.mubr.bf16.mxu0 %v2026
    %2778 = vmatmul.mubr.bf16.gmra.mrb[0].mxu0 %v2025
    %v2779 = vpop.f32.mrb[0].mxu0
    %v2780 = vadd.f32 0.0, %v2779
    %v2781 = vpop.f32.mrb[0].mxu0
    %v2782 = vpop.f32.mrb[0].mxu0
    %v2783 = vadd.f32 0.0, %v2782
    %v2784 = vpop.f32.mrb[0].mxu0
    %2785 = vdwg.mxu0
    %2786 = vmatprep.subr.bf16.mxu0 0
    %2787 = vmatpush1.bf16.msra.mxu0 %v2305
    %2788 = vmatprep.subr.bf16.mxu0 0
    %2789 = vmatpush1.bf16.msra.mxu0 %v2306
    %2790 = vmatprep.subr.bf16.mxu0 0
    %2791 = vmatpush1.bf16.msra.mxu0 %v2307
    %2792 = vmatprep.subr.bf16.mxu0 0
    %2793 = vmatpush1.bf16.msra.mxu0 %v2308
    %2794 = vmatprep.subr.bf16.mxu0 0
    %2795 = vmatpush1.bf16.msra.mxu0 %v2309
    %2796 = vmatprep.subr.bf16.mxu0 0
    %2797 = vmatpush1.bf16.msra.mxu0 %v2310
    %2798 = vmatprep.subr.bf16.mxu0 0
    %2799 = vmatpush1.bf16.msra.mxu0 %v2311
    %2800 = vmatprep.subr.bf16.mxu0 0
    %2801 = vmatpush1.bf16.msra.mxu0 %v2312
    %2802 = vmatprep.subr.bf16.mxu0 0
    %2803 = vmatpush1.bf16.msra.mxu0 %v2313
    %2804 = vmatprep.subr.bf16.mxu0 0
    %2805 = vmatpush1.bf16.msra.mxu0 %v2314
    %2806 = vmatprep.subr.bf16.mxu0 0
    %2807 = vmatpush1.bf16.msra.mxu0 %v2315
    %2808 = vmatprep.subr.bf16.mxu0 0
    %2809 = vmatpush1.bf16.msra.mxu0 %v2316
    %2810 = vmatprep.subr.bf16.mxu0 0
    %2811 = vmatpush1.bf16.msra.mxu0 %v2317
    %2812 = vmatprep.subr.bf16.mxu0 0
    %2813 = vmatpush1.bf16.msra.mxu0 %v2318
    %2814 = vmatprep.subr.bf16.mxu0 0
    %2815 = vmatpush1.bf16.msra.mxu0 %v2319
    %2816 = vmatprep.subr.bf16.mxu0 0
    %2817 = vmatpush1.bf16.msra.mxu0 %v2320
    %2818 = vmatprep.mubr.bf16.mxu0 %v2028
    %2819 = vmatmul.mubr.bf16.gmra.mrb[0].mxu0 %v2027
    %v2820 = vpop.f32.mrb[0].mxu0
    %v2821 = vadd.f32 %v2780, %v2820
    %v2822 = vpop.f32.mrb[0].mxu0
    %v2823 = vpop.f32.mrb[0].mxu0
    %v2824 = vadd.f32 %v2783, %v2823
    %v2825 = vpop.f32.mrb[0].mxu0
    %2826 = vdwg.mxu0
    %2827 = vmatprep.subr.bf16.mxu0 0
    %2828 = vmatpush1.bf16.msra.mxu0 %v2321
    %2829 = vmatprep.subr.bf16.mxu0 0
    %2830 = vmatpush1.bf16.msra.mxu0 %v2322
    %2831 = vmatprep.subr.bf16.mxu0 0
    %2832 = vmatpush1.bf16.msra.mxu0 %v2323
    %2833 = vmatprep.subr.bf16.mxu0 0
    %2834 = vmatpush1.bf16.msra.mxu0 %v2324
    %2835 = vmatprep.subr.bf16.mxu0 0
    %2836 = vmatpush1.bf16.msra.mxu0 %v2325
    %2837 = vmatprep.subr.bf16.mxu0 0
    %2838 = vmatpush1.bf16.msra.mxu0 %v2326
    %2839 = vmatprep.subr.bf16.mxu0 0
    %2840 = vmatpush1.bf16.msra.mxu0 %v2327
    %2841 = vmatprep.subr.bf16.mxu0 0
    %2842 = vmatpush1.bf16.msra.mxu0 %v2328
    %2843 = vmatprep.subr.bf16.mxu0 0
    %2844 = vmatpush1.bf16.msra.mxu0 %v2329
    %2845 = vmatprep.subr.bf16.mxu0 0
    %2846 = vmatpush1.bf16.msra.mxu0 %v2330
    %2847 = vmatprep.subr.bf16.mxu0 0
    %2848 = vmatpush1.bf16.msra.mxu0 %v2331
    %2849 = vmatprep.subr.bf16.mxu0 0
    %2850 = vmatpush1.bf16.msra.mxu0 %v2332
    %2851 = vmatprep.subr.bf16.mxu0 0
    %2852 = vmatpush1.bf16.msra.mxu0 %v2333
    %2853 = vmatprep.subr.bf16.mxu0 0
    %2854 = vmatpush1.bf16.msra.mxu0 %v2334
    %2855 = vmatprep.subr.bf16.mxu0 0
    %2856 = vmatpush1.bf16.msra.mxu0 %v2335
    %2857 = vmatprep.subr.bf16.mxu0 0
    %2858 = vmatpush1.bf16.msra.mxu0 %v2336
    %2859 = vmatprep.mubr.bf16.mxu0 %v2030
    %2860 = vmatmul.mubr.bf16.gmra.mrb[0].mxu0 %v2029
    %v2861 = vpop.f32.mrb[0].mxu0
    %v2862 = vadd.f32 %v2821, %v2861
    %v2863 = vpop.f32.mrb[0].mxu0
    %v2864 = vpop.f32.mrb[0].mxu0
    %v2865 = vadd.f32 %v2824, %v2864
    %v2866 = vpop.f32.mrb[0].mxu0
    %2867 = vdwg.mxu0
    %2868 = vmatprep.subr.bf16.mxu0 0
    %2869 = vmatpush1.bf16.msra.mxu0 %v2337
    %2870 = vmatprep.subr.bf16.mxu0 0
    %2871 = vmatpush1.bf16.msra.mxu0 %v2338
    %2872 = vmatprep.subr.bf16.mxu0 0
    %2873 = vmatpush1.bf16.msra.mxu0 %v2339
    %2874 = vmatprep.subr.bf16.mxu0 0
    %2875 = vmatpush1.bf16.msra.mxu0 %v2340
    %2876 = vmatprep.subr.bf16.mxu0 0
    %2877 = vmatpush1.bf16.msra.mxu0 %v2341
    %2878 = vmatprep.subr.bf16.mxu0 0
    %2879 = vmatpush1.bf16.msra.mxu0 %v2342
    %2880 = vmatprep.subr.bf16.mxu0 0
    %2881 = vmatpush1.bf16.msra.mxu0 %v2343
    %2882 = vmatprep.subr.bf16.mxu0 0
    %2883 = vmatpush1.bf16.msra.mxu0 %v2344
    %2884 = vmatprep.subr.bf16.mxu0 0
    %2885 = vmatpush1.bf16.msra.mxu0 %v2345
    %2886 = vmatprep.subr.bf16.mxu0 0
    %2887 = vmatpush1.bf16.msra.mxu0 %v2346
    %2888 = vmatprep.subr.bf16.mxu0 0
    %2889 = vmatpush1.bf16.msra.mxu0 %v2347
    %2890 = vmatprep.subr.bf16.mxu0 0
    %2891 = vmatpush1.bf16.msra.mxu0 %v2348
    %2892 = vmatprep.subr.bf16.mxu0 0
    %2893 = vmatpush1.bf16.msra.mxu0 %v2349
    %2894 = vmatprep.subr.bf16.mxu0 0
    %2895 = vmatpush1.bf16.msra.mxu0 %v2350
    %2896 = vmatprep.subr.bf16.mxu0 0
    %2897 = vmatpush1.bf16.msra.mxu0 %v2351
    %2898 = vmatprep.subr.bf16.mxu0 0
    %2899 = vmatpush1.bf16.msra.mxu0 %v2352
    %2900 = vmatprep.mubr.bf16.mxu0 %v2032
    %2901 = vmatmul.mubr.bf16.gmra.mrb[0].mxu0 %v2031
    %v2902 = vpop.f32.mrb[0].mxu0
    %v2903 = vadd.f32 %v2862, %v2902
    %v2904 = vpop.f32.mrb[0].mxu0
    %v2905 = vpop.f32.mrb[0].mxu0
    %v2906 = vadd.f32 %v2865, %v2905
    %v2907 = vpop.f32.mrb[0].mxu0
    %2908 = vdwg.mxu0
    %v2909 = vadd.f32 %v2739, %v2903
    %v2910 = vadd.f32 %v2742, %v2906
    %v2911 = vmul.f32 %v2909, 1.75
    %v2912 = vmul.f32 %v2910, 1.75
    %v2913 = vadd.f32 %v2911, 7.0
    %v2914 = vadd.f32 %v2912, 7.0
    %2915 = vst [vmem:[#allocation7] sm:$0xff] %v2913
    %2916 = vst [vmem:[#allocation7 + $0x8] sm:$0x1f] %v2914
    // Predicated region
    $region18: #{tpu_custom_call.1} parent=1 // pred_check
      _
    $region19: #{tpu_custom_call.1} parent=1 // pred_check_branch
      %2918 = sbr.rel (0) target = $region21
    $region20: #{tpu_custom_call.1} parent=1 // pred_region
      %s2920 = ssub.s32 256, 256
      %2921 = vsyncadd [#allocation4], %s2920
      %s2922 = sshll.u32 [#allocation7], 4
      %s2923 = int_to_ptr.vmem [resolvable:$true] %s2922
      %2928 = dma.vmem_to_hbm [thread:$0]  %s2923, 256, %s2, [#allocation4], 128, 128, 8
    $region21: #{tpu_custom_call.1} parent=1 // pred_fallthru
      _
    // Predicated region
    $region22: #{tpu_custom_call.1} parent=1 // pred_check
      _
    $region23: #{tpu_custom_call.1} parent=1 // pred_check_branch
      %2930 = sbr.rel (0) target = $region25
    $region24: #{tpu_custom_call.1} parent=1 // pred_region
      %2931 = dma.done [#allocation4], 256
    $region25: #{tpu_custom_call.1} parent=1 // pred_fallthru
      _
    %2932 = vsyncpa [#allocation3], 1
    %2933 = vsyncpa [#allocation6], 1
    %2934 = vsyncpa [#allocation4], 1

</llo_original>
